<compile_context>
chip_gen: v7x
topology: tpu7x:2x2x1
jax: 0.10.0
libtpu: 0.0.40
codegen_flags: <defaults>
</compile_context>

<pallas_src>
import numpy as np
import jax
import jax.numpy as jnp
from jax.experimental import pallas as pl
from jax.experimental.pallas import tpu as pltpu

TM = 512          # row tile over N*H*W (512-wide tiles ~85% of HBM roofline)
RC = 128          # in-kernel row chunk: bounds live f32 matmul result to 64 KiB
TH = 8            # spatial row tile for the in-kernel halo-tiled 3x3 conv
LANE = 128        # pad fused (channel, group) dims to a multiple of 128 lanes
VMEM_LIMIT = 64 * 1024 * 1024


def _pad_to(n, m=LANE):
    return ((n + m - 1) // m) * m


# --------------------------------------------------------------------------
# p4m (D4) group machinery -- setup-time weight transformation (numpy glue)
# --------------------------------------------------------------------------
def _d4_ops():
    def make(m, r):
        def op(f):
            g = np.rot90(f, k=r, axes=(-2, -1))
            if m:
                g = np.flip(g, axis=-2)
            return g
        return op
    return [make(m, r) for m in (0, 1) for r in (0, 1, 2, 3)]


def _d4_tables():
    ops = _d4_ops()
    probe = np.arange(9.0).reshape(3, 3)
    imgs = [op(probe) for op in ops]

    def find(img):
        for k, t in enumerate(imgs):
            if np.array_equal(img, t):
                return k
        raise AssertionError("not a D4 image")

    mult = np.array([[find(ops[a](ops[b](probe))) for b in range(8)]
                     for a in range(8)])
    inv = np.array([int(np.where(mult[a] == 0)[0][0]) for a in range(8)])
    return ops, mult, inv


_OPS, _MULT, _INV = _d4_tables()


def p4m_filter_bank(w):
    """Base weight (Co, Ci, 8, k, k) -> transformed bank (Co*8, Ci*8, k, k)."""
    w = np.asarray(w)
    Co, Ci, G, k, _ = w.shape
    bank = np.zeros((Co, 8, Ci, 8, k, k), dtype=w.dtype)
    for j in range(8):
        ji = _INV[j]
        for s in range(8):
            src = _MULT[ji][s]
            bank[:, j, :, s] = _OPS[j](w[:, :, src])
    return jnp.asarray(bank.reshape(Co * 8, Ci * 8, k, k))


# --------------------------------------------------------------------------
# Kernel 1: 1x1 group conv as matmul + per-tile BN partial stats
# --------------------------------------------------------------------------
def _mm_stats_kernel(x_ref, w_ref, y_ref, psum_ref, pssq_ref):
    tm = x_ref.shape[0]
    Nc = w_ref.shape[1]
    w = w_ref[...]
    s = jnp.zeros((8, Nc), jnp.float32)
    q = jnp.zeros((8, Nc), jnp.float32)
    # RC-row chunks bound the live f32 accumulation to one 64 KiB slab.
    for c in range(tm // RC):
        r = c * RC
        yc = jnp.dot(x_ref[pl.ds(r, RC), :], w,
                     preferred_element_type=jnp.float32)
        y_ref[pl.ds(r, RC), :] = yc.astype(y_ref.dtype)
        s = s + jnp.sum(yc.reshape(RC // 8, 8, Nc), axis=0)
        q = q + jnp.sum((yc * yc).reshape(RC // 8, 8, Nc), axis=0)
    psum_ref[...] = s
    pssq_ref[...] = q


def matmul_stats(x, w):
    """y = x @ w (bf16 in/out, f32 MXU accumulation) plus per-row-tile partial
    column sum / sum-of-squares (f32, sublane-padded to 8) for batch norm."""
    M, K = x.shape
    K2, Nc = w.shape
    assert K == K2 and K % LANE == 0 and Nc % LANE == 0
    assert M % TM == 0 and TM % RC == 0   # TODO(synk): pad last row tile
    T = M // TM
    return pl.pallas_call(
        _mm_stats_kernel,
        grid_spec=pltpu.PrefetchScalarGridSpec(
            num_scalar_prefetch=0,
            grid=(T,),
            in_specs=[pl.BlockSpec((TM, K), lambda i: (i, 0)),
                      pl.BlockSpec((K, Nc), lambda i: (0, 0))],
            out_specs=(pl.BlockSpec((TM, Nc), lambda i: (i, 0)),
                       pl.BlockSpec((None, 8, Nc), lambda i: (i, 0, 0)),
                       pl.BlockSpec((None, 8, Nc), lambda i: (i, 0, 0)))),
        out_shape=(jax.ShapeDtypeStruct((M, Nc), jnp.bfloat16),
                   jax.ShapeDtypeStruct((T, 8, Nc), jnp.float32),
                   jax.ShapeDtypeStruct((T, 8, Nc), jnp.float32)),
        compiler_params=pltpu.CompilerParams(
            dimension_semantics=("parallel",),
            vmem_limit_bytes=VMEM_LIMIT),
    )(x, w)


# --------------------------------------------------------------------------
# Kernel 2: 3x3 group conv, halo-tiled, kw folded into lanes, fused
#           bn1-affine+ReLU prologue, bf16 VMEM scratch, per-tile stats
# --------------------------------------------------------------------------
def _conv3x3_stats_kernel(y1_ref, sc_ref, sh_ref, w_ref,
                          y2_ref, psum_ref, pssq_ref, t_scr):
    t = pl.program_id(1)
    nt = pl.num_programs(1)
    H, W, Cp = y1_ref.shape
    th, Cop = y2_ref.shape[0], y2_ref.shape[2]
    rows = (th + 2) * W

    sc = sc_ref[...].reshape(1, 1, Cp)
    sh = sh_ref[...].reshape(1, 1, Cp)

    # Halo-tiled prologue: relu(bn1(.)) for only th+2 rows (the 2 halo rows are
    # re-read), no cross-t scratch carry, no full-image zeroing.
    r0 = pl.multiple_of(t * th, th)
    mid = jnp.maximum(
        y1_ref[pl.ds(r0, th), :, :].astype(jnp.float32) * sc + sh, 0.0)
    top_raw = y1_ref[pl.ds(jnp.maximum(r0 - 1, 0), 1), :, :].astype(jnp.float32)
    bot_raw = y1_ref[pl.ds(jnp.minimum(r0 + th, H - 1), 1), :, :].astype(jnp.float32)
    top = jnp.where(t > 0, jnp.maximum(top_raw * sc + sh, 0.0), 0.0)
    bot = jnp.where(t < nt - 1, jnp.maximum(bot_raw * sc + sh, 0.0), 0.0)
    a = jnp.concatenate([top, mid, bot], axis=0)          # (th+2, W, Cp) f32

    # Fold kw into the lane dim: scratch row j*W + w holds
    # [a1pad[r0+j, w+0], a1pad[r0+j, w+1], a1pad[r0+j, w+2]] (Cp lanes each).
    zc = jnp.zeros((th + 2, 1, Cp), jnp.float32)
    t_scr[:, Cp:2 * Cp] = a.astype(jnp.bfloat16).reshape(rows, Cp)
    t_scr[:, 0:Cp] = jnp.concatenate(
        [zc, a[:, :W - 1, :]], axis=1).astype(jnp.bfloat16).reshape(rows, Cp)
    t_scr[:, 2 * Cp:3 * Cp] = jnp.concatenate(
        [a[:, 1:, :], zc], axis=1).astype(jnp.bfloat16).reshape(rows, Cp)

    # 3 matmuls over kh, each tap a full-width, tile-aligned slab (W % 8 == 0);
    # accumulator is th*W x Cop f32 (64 KiB at th=8, W=16, Cop=128).
    acc = jnp.zeros((th * W, Cop), jnp.float32)
    for kh in range(3):
        acc = acc + jnp.dot(t_scr[pl.ds(kh * W, th * W), :], w_ref[kh],
                            preferred_element_type=jnp.float32)

    y2_ref[...] = acc.reshape(th, W, Cop).astype(y2_ref.dtype)
    psum_ref[...] = jnp.sum(acc.reshape(th * W // 8, 8, Cop), axis=0)
    pssq_ref[...] = jnp.sum((acc * acc).reshape(th * W // 8, 8, Cop), axis=0)


def conv3x3_stats(y1_nhwc, sc1, sh1, w_fold, th=TH):
    """3x3, pad=1, stride=1 group conv of relu(bn1(y1)) with per-tile stats."""
    N, H, W, Cp = y1_nhwc.shape
    Cop = w_fold.shape[2]
    assert H % th == 0 and W % 8 == 0 and Cp % LANE == 0 and Cop % LANE == 0
    Ht = H // th
    return pl.pallas_call(
        _conv3x3_stats_kernel,
        grid_spec=pltpu.PrefetchScalarGridSpec(
            num_scalar_prefetch=0,
            grid=(N, Ht),
            in_specs=[pl.BlockSpec((None, H, W, Cp), lambda n, t: (n, 0, 0, 0)),
                      pl.BlockSpec((1, Cp), lambda n, t: (0, 0)),
                      pl.BlockSpec((1, Cp), lambda n, t: (0, 0)),
                      pl.BlockSpec((3, 3 * Cp, Cop), lambda n, t: (0, 0, 0))],
            out_specs=(pl.BlockSpec((None, th, W, Cop),
                                    lambda n, t: (n, t, 0, 0)),
                       pl.BlockSpec((None, None, 8, Cop),
                                    lambda n, t: (n, t, 0, 0)),
                       pl.BlockSpec((None, None, 8, Cop),
                                    lambda n, t: (n, t, 0, 0))),
            scratch_shapes=[pltpu.VMEM(((th + 2) * W, 3 * Cp), jnp.bfloat16)]),
        out_shape=(jax.ShapeDtypeStruct((N, H, W, Cop), jnp.bfloat16),
                   jax.ShapeDtypeStruct((N, Ht, 8, Cop), jnp.float32),
                   jax.ShapeDtypeStruct((N, Ht, 8, Cop), jnp.float32)),
        compiler_params=pltpu.CompilerParams(
            dimension_semantics=("parallel", "parallel"),
            vmem_limit_bytes=VMEM_LIMIT),
    )(y1_nhwc, sc1, sh1, w_fold)


# --------------------------------------------------------------------------
# Kernel 3: conv3 (1x1, fused bn2-affine+ReLU prologue) + shortcut 1x1 conv,
#           one kernel / one row grid, per-tile stats for both.
# --------------------------------------------------------------------------
def _dual_mm_stats_kernel(y2_ref, sc2_ref, sh2_ref, x_ref, w3_ref, ws_ref,
                          y3_ref, ysh_ref, ps3_ref, pq3_ref, pss_ref, pqs_ref):
    tm = y2_ref.shape[0]
    Nc = w3_ref.shape[1]
    w3 = w3_ref[...]
    ws = ws_ref[...]
    sc2 = sc2_ref[...]
    sh2 = sh2_ref[...]
    z = jnp.zeros((8, Nc), jnp.float32)
    s3, q3, ss, qs = z, z, z, z
    for c in range(tm // RC):
        r = c * RC
        a2 = jnp.maximum(y2_ref[pl.ds(r, RC), :].astype(jnp.float32) * sc2
                         + sh2, 0.0).astype(jnp.bfloat16)
        y3 = jnp.dot(a2, w3, preferred_element_type=jnp.float32)
        ys = jnp.dot(x_ref[pl.ds(r, RC), :], ws,
                     preferred_element_type=jnp.float32)
        y3_ref[pl.ds(r, RC), :] = y3.astype(y3_ref.dtype)
        ysh_ref[pl.ds(r, RC), :] = ys.astype(ysh_ref.dtype)
        s3 = s3 + jnp.sum(y3.reshape(RC // 8, 8, Nc), axis=0)
        q3 = q3 + jnp.sum((y3 * y3).reshape(RC // 8, 8, Nc), axis=0)
        ss = ss + jnp.sum(ys.reshape(RC // 8, 8, Nc), axis=0)
        qs = qs + jnp.sum((ys * ys).reshape(RC // 8, 8, Nc), axis=0)
    ps3_ref[...] = s3
    pq3_ref[...] = q3
    pss_ref[...] = ss
    pqs_ref[...] = qs


def dual_matmul_stats(y2, sc2, sh2, x, w3, ws):
    M, K2 = y2.shape
    _, Kx = x.shape
    Nc = w3.shape[1]
    assert ws.shape == (Kx, Nc) and w3.shape[0] == K2
    assert M % TM == 0 and TM % RC == 0
    assert K2 % LANE == 0 and Kx % LANE == 0 and Nc % LANE == 0
    T = M // TM
    stat = jax.ShapeDtypeStruct((T, 8, Nc), jnp.float32)
    stat_spec = pl.BlockSpec((None, 8, Nc), lambda i: (i, 0, 0))
    return pl.pallas_call(
        _dual_mm_stats_kernel,
        grid_spec=pltpu.PrefetchScalarGridSpec(
            num_scalar_prefetch=0,
            grid=(T,),
            in_specs=[pl.BlockSpec((TM, K2), lambda i: (i, 0)),
                      pl.BlockSpec((1, K2), lambda i: (0, 0)),
                      pl.BlockSpec((1, K2), lambda i: (0, 0)),
                      pl.BlockSpec((TM, Kx), lambda i: (i, 0)),
                      pl.BlockSpec((K2, Nc), lambda i: (0, 0)),
                      pl.BlockSpec((Kx, Nc), lambda i: (0, 0))],
            out_specs=(pl.BlockSpec((TM, Nc), lambda i: (i, 0)),
                       pl.BlockSpec((TM, Nc), lambda i: (i, 0)),
                       stat_spec, stat_spec, stat_spec, stat_spec)),
        out_shape=(jax.ShapeDtypeStruct((M, Nc), jnp.bfloat16),
                   jax.ShapeDtypeStruct((M, Nc), jnp.bfloat16),
                   stat, stat, stat, stat),
        compiler_params=pltpu.CompilerParams(
            dimension_semantics=("parallel",),
            vmem_limit_bytes=VMEM_LIMIT),
    )(y2, sc2, sh2, x, w3, ws)


# --------------------------------------------------------------------------
# Kernel 4: final epilogue  relu(bn3(y3) + bn_sc(y_shortcut)), bf16 writeback
# --------------------------------------------------------------------------
def _affine_add_relu_kernel(y_ref, sc_ref, sh_ref, r_ref, rsc_ref, rsh_ref,
                            o_ref):
    main = y_ref[...].astype(jnp.float32) * sc_ref[...] + sh_ref[...]
    res = r_ref[...].astype(jnp.float32) * rsc_ref[...] + rsh_ref[...]
    o_ref[...] = jnp.maximum(main + res, 0.0).astype(o_ref.dtype)


def affine_add_relu(y, sc, sh, r, rsc, rsh):
    # TODO(synk): fuse this epilogue into the next block's conv1 prologue.
    M, Nc = y.shape
    assert M % TM == 0 and Nc % LANE == 0
    return pl.pallas_call(
        _affine_add_relu_kernel,
        grid=(M // TM,),
        in_specs=[pl.BlockSpec((TM, Nc), lambda i: (i, 0)),
                  pl.BlockSpec((1, Nc), lambda i: (0, 0)),
                  pl.BlockSpec((1, Nc), lambda i: (0, 0)),
                  pl.BlockSpec((TM, Nc), lambda i: (i, 0)),
                  pl.BlockSpec((1, Nc), lambda i: (0, 0)),
                  pl.BlockSpec((1, Nc), lambda i: (0, 0))],
        out_specs=pl.BlockSpec((TM, Nc), lambda i: (i, 0)),
        out_shape=jax.ShapeDtypeStruct((M, Nc), jnp.bfloat16),
        compiler_params=pltpu.CompilerParams(
            dimension_semantics=("parallel",),
            vmem_limit_bytes=VMEM_LIMIT),
    )(y, sc, sh, r, rsc, rsh)


# --------------------------------------------------------------------------
# JAX glue
# --------------------------------------------------------------------------
def bn_fold(psum, pssq, gamma, beta, count, n_pad, eps=1e-5):
    """Training-mode BatchNorm3d fold from per-tile partial column stats.

    Columns are (channel-major, group-minor), zero-padded to n_pad lanes;
    returned scale/shift are lane-padded with zeros (padded activations stay 0).
    """
    C = gamma.shape[0]
    Np = psum.shape[-1]
    s = psum.reshape(-1, Np).sum(axis=0)[:C * 8].reshape(C, 8).sum(axis=1)
    q = pssq.reshape(-1, Np).sum(axis=0)[:C * 8].reshape(C, 8).sum(axis=1)
    mean = s / count
    var = jnp.maximum(q / count - mean * mean, 0.0)   # clamp E[x^2]-E[x]^2 >= 0
    scale = gamma / jnp.sqrt(var + eps)
    shift = beta - mean * scale
    pad = n_pad - C * 8
    scale8 = jnp.pad(jnp.repeat(scale, 8), (0, pad))
    shift8 = jnp.pad(jnp.repeat(shift, 8), (0, pad))
    return scale8[None, :], shift8[None, :]


def bottleneck_forward(x, params, eps=1e-5):
    """x: (N, in_planes, 8, H, W) -> (N, 4*planes, 8, H, W)."""
    N, Cin, G, H, W = x.shape
    M = N * H * W

    bank1 = p4m_filter_bank(params["w1"])[:, :, 0, 0]    # (P8,  Cin8)
    bank2 = p4m_filter_bank(params["w2"])                # (P8,  P8, 3, 3)
    bank3 = p4m_filter_bank(params["w3"])[:, :, 0, 0]    # (O8,  P8)
    banks = p4m_filter_bank(params["wsc"])[:, :, 0, 0]   # (O8,  Cin8)

    K1 = Cin * G
    P8 = bank1.shape[0]
    O8 = bank3.shape[0]
    K1p, P8p, O8p = _pad_to(K1), _pad_to(P8), _pad_to(O8)

    # Lane-pad every matmul operand/output dim to multiples of 128.
    w1m = jnp.pad(bank1.T, ((0, K1p - K1), (0, P8p - P8))).astype(jnp.bfloat16)
    w3m = jnp.pad(bank3.T, ((0, P8p - P8), (0, O8p - O8))).astype(jnp.bfloat16)
    wsm = jnp.pad(banks.T, ((0, K1p - K1), (0, O8p - O8))).astype(jnp.bfloat16)
    w2t = jnp.pad(jnp.transpose(bank2, (2, 3, 1, 0)),
                  ((0, 0), (0, 0), (0, P8p - P8), (0, P8p - P8)))
    w2fold = w2t.reshape(3, 3 * P8p, P8p).astype(jnp.bfloat16)  # kw folded in K

    # (N, C, 8, H, W) -> (N*H*W, Cpad), fused (channel, group) lane-dense, bf16
    x2 = jnp.transpose(x, (0, 3, 4, 1, 2)).reshape(M, K1)
    x2 = jnp.pad(x2, ((0, 0), (0, K1p - K1))).astype(jnp.bfloat16)

    # conv1 (1x1 p4m) -> y1 (bf16) + bn1 batch stats
    y1, s1, q1 = matmul_stats(x2, w1m)
    sc1, sh1 = bn_fold(s1, q1, params["g1"], params["b1"], M * 8, P8p, eps)

    # conv2 (3x3 p4m, pad=1, stride=1): bn1 affine+relu fused prologue, halo
    # tiled, kw folded into lanes, bf16 VMEM scratch (no HBM im2col).
    y2, s2, q2 = conv3x3_stats(y1.reshape(N, H, W, P8p), sc1, sh1, w2fold)
    sc2, sh2 = bn_fold(s2, q2, params["g2"], params["b2"], M * 8, P8p, eps)

    # conv3 (1x1) + shortcut (1x1) share one kernel / one row grid; the bn2
    # affine + relu on a2 is fused as the prologue of the conv3 matmul.
    y3, ysh, s3, q3, ssh, qsh = dual_matmul_stats(
        y2.reshape(M, P8p), sc2, sh2, x2, w3m, wsm)
    sc3, sh3 = bn_fold(s3, q3, params["g3"], params["b3"], M * 8, O8p, eps)
    scS, shS = bn_fold(ssh, qsh, params["gsc"], params["bsc"], M * 8, O8p, eps)

    out2 = affine_add_relu(y3, sc3, sh3, ysh, scS, shS)   # (M, O8p) bf16

    out = out2[:, :O8].astype(jnp.float32)                # drop lane padding
    Cout = O8 // 8
    return jnp.transpose(out.reshape(N, H, W, Cout, 8), (0, 3, 4, 1, 2))


# --------------------------------------------------------------------------
# Pure-JAX reference (lax.conv based, same bf16-input precision) for checking
# --------------------------------------------------------------------------
def reference_forward(x, params, eps=1e-5):
    N, Cin, G, H, W = x.shape
    xc = x.reshape(N, Cin * G, H, W)
    bank1 = p4m_filter_bank(params["w1"])
    bank2 = p4m_filter_bank(params["w2"])
    bank3 = p4m_filter_bank(params["w3"])
    banks = p4m_filter_bank(params["wsc"])

    def conv(inp, bank, pad):
        return jax.lax.conv_general_dilated(
            inp.astype(jnp.bfloat16), bank.astype(jnp.bfloat16),
            window_strides=(1, 1), padding=[(pad, pad), (pad, pad)],
            dimension_numbers=("NCHW", "OIHW", "NCHW"),
            preferred_element_type=jnp.float32)

    def bn(y, gamma, beta):
        Nn, CG, Hh, Ww = y.shape
        C = gamma.shape[0]
        yr = y.reshape(Nn, C, 8, Hh, Ww)
        mean = yr.mean(axis=(0, 2, 3, 4), keepdims=True)
        var = ((yr - mean) ** 2).mean(axis=(0, 2, 3, 4), keepdims=True)
        # normalize the bf16-rounded activations (mirrors the kernels'
        # bf16 activation writeback); stats come from the f32 accumulation
        yq = yr.astype(jnp.bfloat16).astype(jnp.float32)
        out = ((yq - mean) / jnp.sqrt(var + eps) * gamma.reshape(1, C, 1, 1, 1)
               + beta.reshape(1, C, 1, 1, 1))
        return out.reshape(Nn, C * 8, Hh, Ww)

    y1 = jax.nn.relu(bn(conv(xc, bank1, 0), params["g1"], params["b1"]))
    y2 = jax.nn.relu(bn(conv(y1, bank2, 1), params["g2"], params["b2"]))
    y3 = bn(conv(y2, bank3, 0), params["g3"], params["b3"])
    ysc = bn(conv(xc, banks, 0), params["gsc"], params["bsc"])
    out = jax.nn.relu(y3 + ysc)
    # mirror the kernels' bf16 epilogue writeback
    out = out.astype(jnp.bfloat16).astype(jnp.float32)
    return out.reshape(N, -1, 8, H, W)


# --------------------------------------------------------------------------
if __name__ == "__main__":
    in_planes, planes, expansion = 4, 2, 4
    N, H, W, G = 2, 16, 16, 8

    key = jax.random.PRNGKey(0)
    k1, k2, k3, k4, kx = jax.random.split(key, 5)

    def init_w(k, co, ci, ks):
        std = (2.0 / (ci * 8 * ks * ks)) ** 0.5
        return jax.random.normal(k, (co, ci, 8, ks, ks), jnp.float32) * std

    params = dict(
        w1=init_w(k1, planes, in_planes, 1),
        w2=init_w(k2, planes, planes, 3),
        w3=init_w(k3, expansion * planes, planes, 1),
        wsc=init_w(k4, expansion * planes, in_planes, 1),
        g1=jnp.ones((planes,), jnp.float32), b1=jnp.zeros((planes,), jnp.float32),
        g2=jnp.ones((planes,), jnp.float32), b2=jnp.zeros((planes,), jnp.float32),
        g3=jnp.ones((expansion * planes,), jnp.float32),
        b3=jnp.zeros((expansion * planes,), jnp.float32),
        gsc=jnp.ones((expansion * planes,), jnp.float32),
        bsc=jnp.zeros((expansion * planes,), jnp.float32),
    )

    x = jax.random.normal(kx, (N, in_planes, G, H, W), jnp.float32)

    out = bottleneck_forward(x, params)
    out = jax.block_until_ready(out)
    assert out.shape == (N, expansion * planes, G, H, W)

    ref = reference_forward(x, params)
    np.testing.assert_allclose(np.asarray(out), np.asarray(ref),
                               rtol=2e-2, atol=2e-2)
    print("KERNEL_OK")
</pallas_src>

<mosaic_0001>
module attributes {stable_mosaic.version = 11 : i64} {
  func.func @_mm_stats_kernel(%arg0: i32, %arg1: memref<512x128xbf16, #tpu.memory_space<vmem>>, %arg2: memref<128x128xbf16, #tpu.memory_space<vmem>>, %arg3: memref<512x128xbf16, #tpu.memory_space<vmem>>, %arg4: memref<1x8x128xf32, #tpu.memory_space<vmem>>, %arg5: memref<1x8x128xf32, #tpu.memory_space<vmem>>) attributes {dimension_semantics = [#tpu.dimension_semantics<parallel>], iteration_bounds = array<i64: 1>, scalar_prefetch = 0 : i64, scratch_operands = 0 : i64, tpu.core_type = #tpu.core_type<tc>, window_params = [{transform_indices = @transform_0, window_bounds = array<i64: 512, 128>}, {pipeline_mode = #tpu.pipeline_mode<synchronous>, transform_indices = @transform_1, window_bounds = array<i64: 128, 128>}, {transform_indices = @transform_2, window_bounds = array<i64: 512, 128>}, {transform_indices = @transform_3, window_bounds = array<i64: 1, 8, 128>}, {transform_indices = @transform_4, window_bounds = array<i64: 1, 8, 128>}]} {
    %c0 = arith.constant 0 : index
    %c0_0 = arith.constant 0 : index
    %0 = vector.load %arg2[%c0, %c0_0] : memref<128x128xbf16, #tpu.memory_space<vmem>>, vector<128x128xbf16>
    %cst = arith.constant 0.000000e+00 : f32
    %1 = vector.broadcast %cst : f32 to vector<8x128xf32>
    %cst_1 = arith.constant 0.000000e+00 : f32
    %2 = vector.broadcast %cst_1 : f32 to vector<8x128xf32>
    %c0_2 = arith.constant 0 : index
    %c0_3 = arith.constant 0 : index
    %3 = vector.load %arg1[%c0_2, %c0_3] : memref<512x128xbf16, #tpu.memory_space<vmem>>, vector<128x128xbf16>
    %cst_4 = arith.constant dense<0.000000e+00> : vector<128x128xf32>
    %4 = tpu.matmul %3, %0, %cst_4 {dimension_numbers = #tpu.dot_dimension_numbers<[1], [0], [0], [1], [0, 0, 1, 1], [], []>} : vector<128x128xbf16>, vector<128x128xbf16>, vector<128x128xf32> -> vector<128x128xf32>
    %5 = arith.truncf %4 : vector<128x128xf32> to vector<128x128xbf16>
    %c0_5 = arith.constant 0 : index
    %c0_6 = arith.constant 0 : index
    %6 = vector.load %arg3[%c0_5, %c0_6] : memref<512x128xbf16, #tpu.memory_space<vmem>>, vector<128x128xbf16>
    tpu.vector_store %arg3[%c0_5, %c0_6], %5 {strides = array<i32>} : memref<512x128xbf16, #tpu.memory_space<vmem>>, vector<128x128xbf16>,
    %7 = vector.shape_cast %4 : vector<128x128xf32> to vector<16x8x128xf32>
    %cst_7 = arith.constant dense<0.000000e+00> : vector<8x128xf32>
    %8 = vector.multi_reduction <add>, %7, %cst_7 [0] : vector<16x8x128xf32> to vector<8x128xf32>
    %9 = arith.addf %1, %8 : vector<8x128xf32>
    %10 = arith.mulf %4, %4 : vector<128x128xf32>
    %11 = vector.shape_cast %10 : vector<128x128xf32> to vector<16x8x128xf32>
    %cst_8 = arith.constant dense<0.000000e+00> : vector<8x128xf32>
    %12 = vector.multi_reduction <add>, %11, %cst_8 [0] : vector<16x8x128xf32> to vector<8x128xf32>
    %13 = arith.addf %2, %12 : vector<8x128xf32>
    %c128 = arith.constant 128 : index
    %c0_9 = arith.constant 0 : index
    %14 = vector.load %arg1[%c128, %c0_9] : memref<512x128xbf16, #tpu.memory_space<vmem>>, vector<128x128xbf16>
    %cst_10 = arith.constant dense<0.000000e+00> : vector<128x128xf32>
    %15 = tpu.matmul %14, %0, %cst_10 {dimension_numbers = #tpu.dot_dimension_numbers<[1], [0], [0], [1], [0, 0, 1, 1], [], []>} : vector<128x128xbf16>, vector<128x128xbf16>, vector<128x128xf32> -> vector<128x128xf32>
    %16 = arith.truncf %15 : vector<128x128xf32> to vector<128x128xbf16>
    %c128_11 = arith.constant 128 : index
    %c0_12 = arith.constant 0 : index
    %17 = vector.load %arg3[%c128_11, %c0_12] : memref<512x128xbf16, #tpu.memory_space<vmem>>, vector<128x128xbf16>
    tpu.vector_store %arg3[%c128_11, %c0_12], %16 {strides = array<i32>} : memref<512x128xbf16, #tpu.memory_space<vmem>>, vector<128x128xbf16>,
    %18 = vector.shape_cast %15 : vector<128x128xf32> to vector<16x8x128xf32>
    %cst_13 = arith.constant dense<0.000000e+00> : vector<8x128xf32>
    %19 = vector.multi_reduction <add>, %18, %cst_13 [0] : vector<16x8x128xf32> to vector<8x128xf32>
    %20 = arith.addf %9, %19 : vector<8x128xf32>
    %21 = arith.mulf %15, %15 : vector<128x128xf32>
    %22 = vector.shape_cast %21 : vector<128x128xf32> to vector<16x8x128xf32>
    %cst_14 = arith.constant dense<0.000000e+00> : vector<8x128xf32>
    %23 = vector.multi_reduction <add>, %22, %cst_14 [0] : vector<16x8x128xf32> to vector<8x128xf32>
    %24 = arith.addf %13, %23 : vector<8x128xf32>
    %c256 = arith.constant 256 : index
    %c0_15 = arith.constant 0 : index
    %25 = vector.load %arg1[%c256, %c0_15] : memref<512x128xbf16, #tpu.memory_space<vmem>>, vector<128x128xbf16>
    %cst_16 = arith.constant dense<0.000000e+00> : vector<128x128xf32>
    %26 = tpu.matmul %25, %0, %cst_16 {dimension_numbers = #tpu.dot_dimension_numbers<[1], [0], [0], [1], [0, 0, 1, 1], [], []>} : vector<128x128xbf16>, vector<128x128xbf16>, vector<128x128xf32> -> vector<128x128xf32>
    %27 = arith.truncf %26 : vector<128x128xf32> to vector<128x128xbf16>
    %c256_17 = arith.constant 256 : index
    %c0_18 = arith.constant 0 : index
    %28 = vector.load %arg3[%c256_17, %c0_18] : memref<512x128xbf16, #tpu.memory_space<vmem>>, vector<128x128xbf16>
    tpu.vector_store %arg3[%c256_17, %c0_18], %27 {strides = array<i32>} : memref<512x128xbf16, #tpu.memory_space<vmem>>, vector<128x128xbf16>,
    %29 = vector.shape_cast %26 : vector<128x128xf32> to vector<16x8x128xf32>
    %cst_19 = arith.constant dense<0.000000e+00> : vector<8x128xf32>
    %30 = vector.multi_reduction <add>, %29, %cst_19 [0] : vector<16x8x128xf32> to vector<8x128xf32>
    %31 = arith.addf %20, %30 : vector<8x128xf32>
    %32 = arith.mulf %26, %26 : vector<128x128xf32>
    %33 = vector.shape_cast %32 : vector<128x128xf32> to vector<16x8x128xf32>
    %cst_20 = arith.constant dense<0.000000e+00> : vector<8x128xf32>
    %34 = vector.multi_reduction <add>, %33, %cst_20 [0] : vector<16x8x128xf32> to vector<8x128xf32>
    %35 = arith.addf %24, %34 : vector<8x128xf32>
    %c384 = arith.constant 384 : index
    %c0_21 = arith.constant 0 : index
    %36 = vector.load %arg1[%c384, %c0_21] : memref<512x128xbf16, #tpu.memory_space<vmem>>, vector<128x128xbf16>
    %cst_22 = arith.constant dense<0.000000e+00> : vector<128x128xf32>
    %37 = tpu.matmul %36, %0, %cst_22 {dimension_numbers = #tpu.dot_dimension_numbers<[1], [0], [0], [1], [0, 0, 1, 1], [], []>} : vector<128x128xbf16>, vector<128x128xbf16>, vector<128x128xf32> -> vector<128x128xf32>
    %38 = arith.truncf %37 : vector<128x128xf32> to vector<128x128xbf16>
    %c384_23 = arith.constant 384 : index
    %c0_24 = arith.constant 0 : index
    %39 = vector.load %arg3[%c384_23, %c0_24] : memref<512x128xbf16, #tpu.memory_space<vmem>>, vector<128x128xbf16>
    tpu.vector_store %arg3[%c384_23, %c0_24], %38 {strides = array<i32>} : memref<512x128xbf16, #tpu.memory_space<vmem>>, vector<128x128xbf16>,
    %40 = vector.shape_cast %37 : vector<128x128xf32> to vector<16x8x128xf32>
    %cst_25 = arith.constant dense<0.000000e+00> : vector<8x128xf32>
    %41 = vector.multi_reduction <add>, %40, %cst_25 [0] : vector<16x8x128xf32> to vector<8x128xf32>
    %42 = arith.addf %31, %41 : vector<8x128xf32>
    %43 = arith.mulf %37, %37 : vector<128x128xf32>
    %44 = vector.shape_cast %43 : vector<128x128xf32> to vector<16x8x128xf32>
    %cst_26 = arith.constant dense<0.000000e+00> : vector<8x128xf32>
    %45 = vector.multi_reduction <add>, %44, %cst_26 [0] : vector<16x8x128xf32> to vector<8x128xf32>
    %46 = arith.addf %35, %45 : vector<8x128xf32>
    %c0_27 = arith.constant 0 : index
    %c0_28 = arith.constant 0 : index
    %c0_29 = arith.constant 0 : index
    %47 = vector.load %arg4[%c0_27, %c0_28, %c0_29] : memref<1x8x128xf32, #tpu.memory_space<vmem>>, vector<1x8x128xf32>
    %48 = vector.shape_cast %47 : vector<1x8x128xf32> to vector<8x128xf32>
    %49 = vector.shape_cast %42 : vector<8x128xf32> to vector<1x8x128xf32>
    tpu.vector_store %arg4[%c0_27, %c0_28, %c0_29], %49 {strides = array<i32>} : memref<1x8x128xf32, #tpu.memory_space<vmem>>, vector<1x8x128xf32>,
    %c0_30 = arith.constant 0 : index
    %c0_31 = arith.constant 0 : index
    %c0_32 = arith.constant 0 : index
    %50 = vector.load %arg5[%c0_30, %c0_31, %c0_32] : memref<1x8x128xf32, #tpu.memory_space<vmem>>, vector<1x8x128xf32>
    %51 = vector.shape_cast %50 : vector<1x8x128xf32> to vector<8x128xf32>
    %52 = vector.shape_cast %46 : vector<8x128xf32> to vector<1x8x128xf32>
    tpu.vector_store %arg5[%c0_30, %c0_31, %c0_32], %52 {strides = array<i32>} : memref<1x8x128xf32, #tpu.memory_space<vmem>>, vector<1x8x128xf32>,
    return
  }
  func.func @transform_0(%arg0: i32) -> (i32, i32) {
    %c0_i32 = arith.constant 0 : i32
    %c0_i32_0 = arith.constant 0 : i32
    return %arg0, %c0_i32 : i32, i32
  }
  func.func @transform_1(%arg0: i32) -> (i32, i32) {
    %c0_i32 = arith.constant 0 : i32
    %c0_i32_0 = arith.constant 0 : i32
    %c0_i32_1 = arith.constant 0 : i32
    return %c0_i32, %c0_i32_0 : i32, i32
  }
  func.func @transform_2(%arg0: i32) -> (i32, i32) {
    %c0_i32 = arith.constant 0 : i32
    %c0_i32_0 = arith.constant 0 : i32
    return %arg0, %c0_i32 : i32, i32
  }
  func.func @transform_3(%arg0: i32) -> (i32, i32, i32) {
    %c0_i32 = arith.constant 0 : i32
    %c0_i32_0 = arith.constant 0 : i32
    %c0_i32_1 = arith.constant 0 : i32
    return %arg0, %c0_i32, %c0_i32_0 : i32, i32, i32
  }
  func.func @transform_4(%arg0: i32) -> (i32, i32, i32) {
    %c0_i32 = arith.constant 0 : i32
    %c0_i32_0 = arith.constant 0 : i32
    %c0_i32_1 = arith.constant 0 : i32
    return %arg0, %c0_i32, %c0_i32_0 : i32, i32, i32
  }
}

</mosaic_0001>

<llo_original>
// kernel: tpu_custom_call.1
$region0: #{tpu_custom_call.1}
  #allocation0 [shape = 'u32[]', space=smem, size = 0x4, offset = 0x4, fixed_abs, tag = 'smem constant byte address 0x4 - core index']
  #allocation1 [shape = 'u32[144,128]{1,0:T(1,128)}', space=vmem, size = 0x12000, scoped, tag = 'internal scratch']
  %s0 = inlined_call_operand.hbm [shape: bf16[512,128], index: 0, kind: input, shape index: {}]
  %s1 = inlined_call_operand.hbm [shape: bf16[128,128], index: 1, kind: input, shape index: {}]
  %s2 = inlined_call_operand.hbm [shape: bf16[512,128], index: 2, kind: output, shape index: {0}]
  %s3 = inlined_call_operand.hbm [shape: f32[1,8,128], index: 3, kind: output, shape index: {1}]
  %s4 = inlined_call_operand.hbm [shape: f32[1,8,128], index: 4, kind: output, shape index: {2}]
  %5 = xla_tuple %s2, %s3, %s4
  %s6 = sld [smem:[#allocation0]]
  $region42: #{tpu_custom_call.1} parent=0
    _
  %s8 = ssub.s32 1, %s6
  %s9 = scalar_select 0, %s8, %s6
  $region1: #{tpu_custom_call.1} parent=0
    #allocation2 [shape = 'u8[131072]{0}', space=vmem, size = 0x20000, scoped, tag = 'input window, operand 0, single buffered']
    #allocation3 [shape = 's32[1]{0}', space=sflag, size = 0x4, scoped, tag = 'scoped memory for tpu_custom_call.1']
    #allocation4 [shape = 's32[1]{0}', space=sflag, size = 0x4, scoped, tag = 'scoped memory for tpu_custom_call.1']
    #allocation5 [shape = 'u8[32768]{0}', space=vmem, size = 0x8000, scoped, tag = 'input window, operand 1, single buffered']
    #allocation6 [shape = 's32[1]{0}', space=sflag, size = 0x4, scoped, tag = 'scoped memory for tpu_custom_call.1']
    #allocation7 [shape = 'u8[131072]{0}', space=vmem, size = 0x20000, scoped, tag = 'output window, operand 0, single buffered']
    #allocation8 [shape = 'u8[4096]{0}', space=vmem, size = 0x1000, scoped, tag = 'output window, operand 1, single buffered']
    #allocation9 [shape = 's32[1]{0}', space=sflag, size = 0x4, scoped, tag = 'scoped memory for tpu_custom_call.1']
    #allocation10 [shape = 'u8[4096]{0}', space=vmem, size = 0x1000, scoped, tag = 'output window, operand 2, single buffered']
    %10 = vsyncpa [#allocation3], 0
    %11 = vsyncpa [#allocation6], 0
    %12 = vsyncpa [#allocation4], 0
    %13 = vsyncpa [#allocation9], 0
    // Predicated region
    $region2: #{tpu_custom_call.1} parent=1 // pred_check
      _
    $region3: #{tpu_custom_call.1} parent=1 // pred_check_branch
      %15 = sbr.rel (0) target = $region5
    $region4: #{tpu_custom_call.1} parent=1 // pred_region
      %s17 = ssub.s32 4096, 4096
      %18 = vsyncadd [#allocation3], %s17
      %s19 = sshll.u32 [#allocation2], 4
      %s20 = int_to_ptr.vmem [resolvable:$true] %s19
      %25 = dma.hbm_to_vmem [thread:$0]  %s0, 4096, %s20, [#allocation3], 64, 64, 4
    $region5: #{tpu_custom_call.1} parent=1 // pred_fallthru
      _
    // Predicated region
    $region6: #{tpu_custom_call.1} parent=1 // pred_check
      _
    $region7: #{tpu_custom_call.1} parent=1 // pred_check_branch
      %27 = sbr.rel (0) target = $region9
    $region8: #{tpu_custom_call.1} parent=1 // pred_region
      %s29 = ssub.s32 1024, 1024
      %30 = vsyncadd [#allocation6], %s29
      %s31 = sshll.u32 [#allocation5], 4
      %s32 = int_to_ptr.vmem [resolvable:$true] %s31
      %37 = dma.hbm_to_vmem [thread:$0]  %s1, 1024, %s32, [#allocation6], 64, 64, 4
    $region9: #{tpu_custom_call.1} parent=1 // pred_fallthru
      _
    // Predicated region
    $region10: #{tpu_custom_call.1} parent=1 // pred_check
      _
    $region11: #{tpu_custom_call.1} parent=1 // pred_check_branch
      %39 = sbr.rel (0) target = $region13
    $region12: #{tpu_custom_call.1} parent=1 // pred_region
      %40 = dma.done [#allocation3], 4096
    $region13: #{tpu_custom_call.1} parent=1 // pred_fallthru
      _
    // Predicated region
    $region14: #{tpu_custom_call.1} parent=1 // pred_check
      _
    $region15: #{tpu_custom_call.1} parent=1 // pred_check_branch
      %42 = sbr.rel (0) target = $region17
    $region16: #{tpu_custom_call.1} parent=1 // pred_region
      %43 = dma.done [#allocation6], 1024
    $region17: #{tpu_custom_call.1} parent=1 // pred_fallthru
      _
    %v45 = vld [vmem:[#allocation5] sm:$0xf]
    %v46 = vld [vmem:[#allocation5 + $0x4] sm:$0xf]
    %v47 = vld [vmem:[#allocation5 + $0x8] sm:$0xf]
    %v48 = vld [vmem:[#allocation5 + $0xc] sm:$0xf]
    %v49 = vld [vmem:[#allocation5 + $0x10] sm:$0xf]
    %v50 = vld [vmem:[#allocation5 + $0x14] sm:$0xf]
    %v51 = vld [vmem:[#allocation5 + $0x18] sm:$0xf]
    %v52 = vld [vmem:[#allocation5 + $0x1c] sm:$0xf]
    %v53 = vld [vmem:[#allocation5 + $0x20] sm:$0xf]
    %v54 = vld [vmem:[#allocation5 + $0x24] sm:$0xf]
    %v55 = vld [vmem:[#allocation5 + $0x28] sm:$0xf]
    %v56 = vld [vmem:[#allocation5 + $0x2c] sm:$0xf]
    %v57 = vld [vmem:[#allocation5 + $0x30] sm:$0xf]
    %v58 = vld [vmem:[#allocation5 + $0x34] sm:$0xf]
    %v59 = vld [vmem:[#allocation5 + $0x38] sm:$0xf]
    %v60 = vld [vmem:[#allocation5 + $0x3c] sm:$0xf]
    %v61 = vld [vmem:[#allocation2] sm:$0xf]
    %v62 = vld [vmem:[#allocation2 + $0x4] sm:$0xf]
    %v63 = vld [vmem:[#allocation2 + $0x8] sm:$0xf]
    %v64 = vld [vmem:[#allocation2 + $0xc] sm:$0xf]
    %v65 = vld [vmem:[#allocation2 + $0x10] sm:$0xf]
    %v66 = vld [vmem:[#allocation2 + $0x14] sm:$0xf]
    %v67 = vld [vmem:[#allocation2 + $0x18] sm:$0xf]
    %v68 = vld [vmem:[#allocation2 + $0x1c] sm:$0xf]
    %v69 = vld [vmem:[#allocation2 + $0x20] sm:$0xf]
    %v70 = vld [vmem:[#allocation2 + $0x24] sm:$0xf]
    %v71 = vld [vmem:[#allocation2 + $0x28] sm:$0xf]
    %v72 = vld [vmem:[#allocation2 + $0x2c] sm:$0xf]
    %v73 = vld [vmem:[#allocation2 + $0x30] sm:$0xf]
    %v74 = vld [vmem:[#allocation2 + $0x34] sm:$0xf]
    %v75 = vld [vmem:[#allocation2 + $0x38] sm:$0xf]
    %v76 = vld [vmem:[#allocation2 + $0x3c] sm:$0xf]
    %v93 = vunpack.c.l.b16 %v61
    %v94 = vunpack.c.l.b16 %v62
    %v95 = vunpack.c.l.b16 %v63
    %v96 = vunpack.c.l.b16 %v64
    %v97 = vunpack.c.l.b16 %v65
    %v98 = vunpack.c.l.b16 %v66
    %v99 = vunpack.c.l.b16 %v67
    %v100 = vunpack.c.l.b16 %v68
    %v101 = vunpack.c.l.b16 %v69
    %v102 = vunpack.c.l.b16 %v70
    %v103 = vunpack.c.l.b16 %v71
    %v104 = vunpack.c.l.b16 %v72
    %v105 = vunpack.c.l.b16 %v73
    %v106 = vunpack.c.l.b16 %v74
    %v107 = vunpack.c.l.b16 %v75
    %v108 = vunpack.c.l.b16 %v76
    %v109 = vpack.c.b16 %v94, %v93
    %v110 = vpack.c.b16 %v96, %v95
    %v111 = vpack.c.b16 %v98, %v97
    %v112 = vpack.c.b16 %v100, %v99
    %v113 = vpack.c.b16 %v102, %v101
    %v114 = vpack.c.b16 %v104, %v103
    %v115 = vpack.c.b16 %v106, %v105
    %v116 = vpack.c.b16 %v108, %v107
    %v141 = vunpack.c.l.b16 %v45
    %v142 = vunpack.c.l.b16 %v46
    %v143 = vunpack.c.l.b16 %v47
    %v144 = vunpack.c.l.b16 %v48
    %v145 = vunpack.c.l.b16 %v49
    %v146 = vunpack.c.l.b16 %v50
    %v147 = vunpack.c.l.b16 %v51
    %v148 = vunpack.c.l.b16 %v52
    %v149 = vunpack.c.l.b16 %v53
    %v150 = vunpack.c.l.b16 %v54
    %v151 = vunpack.c.l.b16 %v55
    %v152 = vunpack.c.l.b16 %v56
    %v153 = vunpack.c.l.b16 %v57
    %v154 = vunpack.c.l.b16 %v58
    %v155 = vunpack.c.l.b16 %v59
    %v156 = vunpack.c.l.b16 %v60
    %v157 = vpack.c.b16 %v142, %v141
    %v158 = vpack.c.b16 %v144, %v143
    %v159 = vpack.c.b16 %v146, %v145
    %v160 = vpack.c.b16 %v148, %v147
    %v161 = vpack.c.b16 %v150, %v149
    %v162 = vpack.c.b16 %v152, %v151
    %v163 = vpack.c.b16 %v154, %v153
    %v164 = vpack.c.b16 %v156, %v155
    %173 = vmatprep.subr.bf16.mxu0 0
    %174 = vmatpush1.bf16.msra.mxu0 %v157
    %175 = vmatprep.subr.bf16.mxu0 0
    %176 = vmatpush1.bf16.msra.mxu0 %v158
    %177 = vmatprep.subr.bf16.mxu0 0
    %178 = vmatpush1.bf16.msra.mxu0 %v159
    %179 = vmatprep.subr.bf16.mxu0 0
    %180 = vmatpush1.bf16.msra.mxu0 %v160
    %181 = vmatprep.subr.bf16.mxu0 0
    %182 = vmatpush1.bf16.msra.mxu0 %v161
    %183 = vmatprep.subr.bf16.mxu0 0
    %184 = vmatpush1.bf16.msra.mxu0 %v162
    %185 = vmatprep.subr.bf16.mxu0 0
    %186 = vmatpush1.bf16.msra.mxu0 %v163
    %187 = vmatprep.subr.bf16.mxu0 0
    %188 = vmatpush1.bf16.msra.mxu0 %v164
    %189 = vmatprep.subr.bf16.mxu0 0
    %190 = vmatpush1.bf16.msra.mxu0 0
    %191 = vmatprep.subr.bf16.mxu0 0
    %192 = vmatpush1.bf16.msra.mxu0 0
    %193 = vmatprep.subr.bf16.mxu0 0
    %194 = vmatpush1.bf16.msra.mxu0 0
    %195 = vmatprep.subr.bf16.mxu0 0
    %196 = vmatpush1.bf16.msra.mxu0 0
    %197 = vmatprep.subr.bf16.mxu0 0
    %198 = vmatpush1.bf16.msra.mxu0 0
    %199 = vmatprep.subr.bf16.mxu0 0
    %200 = vmatpush1.bf16.msra.mxu0 0
    %201 = vmatprep.subr.bf16.mxu0 0
    %202 = vmatpush1.bf16.msra.mxu0 0
    %203 = vmatprep.subr.bf16.mxu0 0
    %204 = vmatpush1.bf16.msra.mxu0 0
    %205 = vmatprep.mubr.bf16.mxu0 0
    %206 = vmatmul.mubr.bf16.gmra.mrb[0].mxu0 %v109
    %v207 = vpop.f32.mrb[0].mxu0
    %v208 = vadd.f32 0.0, %v207
    %v209 = vpop.f32.mrb[0].mxu0
    %v210 = vpop.f32.mrb[0].mxu0
    %v211 = vadd.f32 0.0, %v210
    %v212 = vpop.f32.mrb[0].mxu0
    %213 = vmatprep.mubr.bf16.mxu0 0
    %214 = vmatmul.mubr.bf16.gmra.mrb[0].mxu0 %v110
    %v215 = vpop.f32.mrb[0].mxu0
    %v216 = vadd.f32 0.0, %v215
    %v217 = vpop.f32.mrb[0].mxu0
    %v218 = vpop.f32.mrb[0].mxu0
    %v219 = vadd.f32 0.0, %v218
    %v220 = vpop.f32.mrb[0].mxu0
    %221 = vmatprep.mubr.bf16.mxu0 0
    %222 = vmatmul.mubr.bf16.gmra.mrb[0].mxu0 %v111
    %v223 = vpop.f32.mrb[0].mxu0
    %v224 = vadd.f32 0.0, %v223
    %v225 = vpop.f32.mrb[0].mxu0
    %v226 = vpop.f32.mrb[0].mxu0
    %v227 = vadd.f32 0.0, %v226
    %v228 = vpop.f32.mrb[0].mxu0
    %229 = vmatprep.mubr.bf16.mxu0 0
    %230 = vmatmul.mubr.bf16.gmra.mrb[0].mxu0 %v112
    %v231 = vpop.f32.mrb[0].mxu0
    %v232 = vadd.f32 0.0, %v231
    %v233 = vpop.f32.mrb[0].mxu0
    %v234 = vpop.f32.mrb[0].mxu0
    %v235 = vadd.f32 0.0, %v234
    %v236 = vpop.f32.mrb[0].mxu0
    %237 = vmatprep.mubr.bf16.mxu0 0
    %238 = vmatmul.mubr.bf16.gmra.mrb[0].mxu0 %v113
    %v239 = vpop.f32.mrb[0].mxu0
    %v240 = vadd.f32 0.0, %v239
    %v241 = vpop.f32.mrb[0].mxu0
    %v242 = vpop.f32.mrb[0].mxu0
    %v243 = vadd.f32 0.0, %v242
    %v244 = vpop.f32.mrb[0].mxu0
    %245 = vmatprep.mubr.bf16.mxu0 0
    %246 = vmatmul.mubr.bf16.gmra.mrb[0].mxu0 %v114
    %v247 = vpop.f32.mrb[0].mxu0
    %v248 = vadd.f32 0.0, %v247
    %v249 = vpop.f32.mrb[0].mxu0
    %v250 = vpop.f32.mrb[0].mxu0
    %v251 = vadd.f32 0.0, %v250
    %v252 = vpop.f32.mrb[0].mxu0
    %253 = vmatprep.mubr.bf16.mxu0 0
    %254 = vmatmul.mubr.bf16.gmra.mrb[0].mxu0 %v115
    %v255 = vpop.f32.mrb[0].mxu0
    %v256 = vadd.f32 0.0, %v255
    %v257 = vpop.f32.mrb[0].mxu0
    %v258 = vpop.f32.mrb[0].mxu0
    %v259 = vadd.f32 0.0, %v258
    %v260 = vpop.f32.mrb[0].mxu0
    %261 = vmatprep.mubr.bf16.mxu0 0
    %262 = vmatmul.mubr.bf16.gmra.mrb[0].mxu0 %v116
    %v263 = vpop.f32.mrb[0].mxu0
    %v264 = vadd.f32 0.0, %v263
    %v265 = vpop.f32.mrb[0].mxu0
    %v266 = vpop.f32.mrb[0].mxu0
    %v267 = vadd.f32 0.0, %v266
    %v268 = vpop.f32.mrb[0].mxu0
    %269 = vdwg.mxu0
    %v270 = vpack.c.bf16 %v211, %v208
    %v271 = vpack.c.bf16 %v219, %v216
    %v272 = vpack.c.bf16 %v227, %v224
    %v273 = vpack.c.bf16 %v235, %v232
    %v274 = vpack.c.bf16 %v243, %v240
    %v275 = vpack.c.bf16 %v251, %v248
    %v276 = vpack.c.bf16 %v259, %v256
    %v277 = vpack.c.bf16 %v267, %v264
    %v286 = vunpack.c.l.b16 %v270
    %v287 = vunpack.c.h.b16 %v270
    %v288 = vunpack.c.l.b16 %v271
    %v289 = vunpack.c.h.b16 %v271
    %v290 = vunpack.c.l.b16 %v272
    %v291 = vunpack.c.h.b16 %v272
    %v292 = vunpack.c.l.b16 %v273
    %v293 = vunpack.c.h.b16 %v273
    %v294 = vunpack.c.l.b16 %v274
    %v295 = vunpack.c.h.b16 %v274
    %v296 = vunpack.c.l.b16 %v275
    %v297 = vunpack.c.h.b16 %v275
    %v298 = vunpack.c.l.b16 %v276
    %v299 = vunpack.c.h.b16 %v276
    %v300 = vunpack.c.l.b16 %v277
    %v301 = vunpack.c.h.b16 %v277
    %v302 = vpack.c.b16 %v286, %v286
    %v303 = vpack.c.b16 %v287, %v287
    %v304 = vpack.c.b16 %v288, %v288
    %v305 = vpack.c.b16 %v289, %v289
    %v306 = vpack.c.b16 %v290, %v290
    %v307 = vpack.c.b16 %v291, %v291
    %v308 = vpack.c.b16 %v292, %v292
    %v309 = vpack.c.b16 %v293, %v293
    %v310 = vpack.c.b16 %v294, %v294
    %v311 = vpack.c.b16 %v295, %v295
    %v312 = vpack.c.b16 %v296, %v296
    %v313 = vpack.c.b16 %v297, %v297
    %v314 = vpack.c.b16 %v298, %v298
    %v315 = vpack.c.b16 %v299, %v299
    %v316 = vpack.c.b16 %v300, %v300
    %v317 = vpack.c.b16 %v301, %v301
    %334 = vst [vmem:[#allocation7] sm:$0xf] %v302
    %335 = vst [vmem:[#allocation7 + $0x4] sm:$0xf] %v303
    %336 = vst [vmem:[#allocation7 + $0x8] sm:$0xf] %v304
    %337 = vst [vmem:[#allocation7 + $0xc] sm:$0xf] %v305
    %338 = vst [vmem:[#allocation7 + $0x10] sm:$0xf] %v306
    %339 = vst [vmem:[#allocation7 + $0x14] sm:$0xf] %v307
    %340 = vst [vmem:[#allocation7 + $0x18] sm:$0xf] %v308
    %341 = vst [vmem:[#allocation7 + $0x1c] sm:$0xf] %v309
    %342 = vst [vmem:[#allocation7 + $0x20] sm:$0xf] %v310
    %343 = vst [vmem:[#allocation7 + $0x24] sm:$0xf] %v311
    %344 = vst [vmem:[#allocation7 + $0x28] sm:$0xf] %v312
    %345 = vst [vmem:[#allocation7 + $0x2c] sm:$0xf] %v313
    %346 = vst [vmem:[#allocation7 + $0x30] sm:$0xf] %v314
    %347 = vst [vmem:[#allocation7 + $0x34] sm:$0xf] %v315
    %348 = vst [vmem:[#allocation7 + $0x38] sm:$0xf] %v316
    %349 = vst [vmem:[#allocation7 + $0x3c] sm:$0xf] %v317
    %v350 = vadd.f32 %v208, %v211
    %v351 = vadd.f32 %v350, %v216
    %v352 = vadd.f32 %v351, %v219
    %v353 = vadd.f32 %v352, %v224
    %v354 = vadd.f32 %v353, %v227
    %v355 = vadd.f32 %v354, %v232
    %v356 = vadd.f32 %v355, %v235
    %v357 = vadd.f32 %v356, %v240
    %v358 = vadd.f32 %v357, %v243
    %v359 = vadd.f32 %v358, %v248
    %v360 = vadd.f32 %v359, %v251
    %v361 = vadd.f32 %v360, %v256
    %v362 = vadd.f32 %v361, %v259
    %v363 = vadd.f32 %v362, %v264
    %v364 = vadd.f32 %v363, %v267
    %v365 = vadd.f32 %v364, 0.0
    %v366 = vmul.f32 %v208, %v208
    %v367 = vmul.f32 %v211, %v211
    %v368 = vmul.f32 %v216, %v216
    %v369 = vmul.f32 %v219, %v219
    %v370 = vmul.f32 %v224, %v224
    %v371 = vmul.f32 %v227, %v227
    %v372 = vmul.f32 %v232, %v232
    %v373 = vmul.f32 %v235, %v235
    %v374 = vmul.f32 %v240, %v240
    %v375 = vmul.f32 %v243, %v243
    %v376 = vmul.f32 %v248, %v248
    %v377 = vmul.f32 %v251, %v251
    %v378 = vmul.f32 %v256, %v256
    %v379 = vmul.f32 %v259, %v259
    %v380 = vmul.f32 %v264, %v264
    %v381 = vmul.f32 %v267, %v267
    %v382 = vadd.f32 %v366, %v367
    %v383 = vadd.f32 %v382, %v368
    %v384 = vadd.f32 %v383, %v369
    %v385 = vadd.f32 %v384, %v370
    %v386 = vadd.f32 %v385, %v371
    %v387 = vadd.f32 %v386, %v372
    %v388 = vadd.f32 %v387, %v373
    %v389 = vadd.f32 %v388, %v374
    %v390 = vadd.f32 %v389, %v375
    %v391 = vadd.f32 %v390, %v376
    %v392 = vadd.f32 %v391, %v377
    %v393 = vadd.f32 %v392, %v378
    %v394 = vadd.f32 %v393, %v379
    %v395 = vadd.f32 %v394, %v380
    %v396 = vadd.f32 %v395, %v381
    %v397 = vadd.f32 %v396, 0.0
    %v398 = vld [vmem:[#allocation2 + $0x40] sm:$0xf]
    %v399 = vld [vmem:[#allocation2 + $0x44] sm:$0xf]
    %v400 = vld [vmem:[#allocation2 + $0x48] sm:$0xf]
    %v401 = vld [vmem:[#allocation2 + $0x4c] sm:$0xf]
    %v402 = vld [vmem:[#allocation2 + $0x50] sm:$0xf]
    %v403 = vld [vmem:[#allocation2 + $0x54] sm:$0xf]
    %v404 = vld [vmem:[#allocation2 + $0x58] sm:$0xf]
    %v405 = vld [vmem:[#allocation2 + $0x5c] sm:$0xf]
    %v406 = vld [vmem:[#allocation2 + $0x60] sm:$0xf]
    %v407 = vld [vmem:[#allocation2 + $0x64] sm:$0xf]
    %v408 = vld [vmem:[#allocation2 + $0x68] sm:$0xf]
    %v409 = vld [vmem:[#allocation2 + $0x6c] sm:$0xf]
    %v410 = vld [vmem:[#allocation2 + $0x70] sm:$0xf]
    %v411 = vld [vmem:[#allocation2 + $0x74] sm:$0xf]
    %v412 = vld [vmem:[#allocation2 + $0x78] sm:$0xf]
    %v413 = vld [vmem:[#allocation2 + $0x7c] sm:$0xf]
    %v430 = vunpack.c.l.b16 %v398
    %v431 = vunpack.c.l.b16 %v399
    %v432 = vunpack.c.l.b16 %v400
    %v433 = vunpack.c.l.b16 %v401
    %v434 = vunpack.c.l.b16 %v402
    %v435 = vunpack.c.l.b16 %v403
    %v436 = vunpack.c.l.b16 %v404
    %v437 = vunpack.c.l.b16 %v405
    %v438 = vunpack.c.l.b16 %v406
    %v439 = vunpack.c.l.b16 %v407
    %v440 = vunpack.c.l.b16 %v408
    %v441 = vunpack.c.l.b16 %v409
    %v442 = vunpack.c.l.b16 %v410
    %v443 = vunpack.c.l.b16 %v411
    %v444 = vunpack.c.l.b16 %v412
    %v445 = vunpack.c.l.b16 %v413
    %v446 = vpack.c.b16 %v431, %v430
    %v447 = vpack.c.b16 %v433, %v432
    %v448 = vpack.c.b16 %v435, %v434
    %v449 = vpack.c.b16 %v437, %v436
    %v450 = vpack.c.b16 %v439, %v438
    %v451 = vpack.c.b16 %v441, %v440
    %v452 = vpack.c.b16 %v443, %v442
    %v453 = vpack.c.b16 %v445, %v444
    %462 = vmatprep.subr.bf16.mxu0 0
    %463 = vmatpush1.bf16.msra.mxu0 %v157
    %464 = vmatprep.subr.bf16.mxu0 0
    %465 = vmatpush1.bf16.msra.mxu0 %v158
    %466 = vmatprep.subr.bf16.mxu0 0
    %467 = vmatpush1.bf16.msra.mxu0 %v159
    %468 = vmatprep.subr.bf16.mxu0 0
    %469 = vmatpush1.bf16.msra.mxu0 %v160
    %470 = vmatprep.subr.bf16.mxu0 0
    %471 = vmatpush1.bf16.msra.mxu0 %v161
    %472 = vmatprep.subr.bf16.mxu0 0
    %473 = vmatpush1.bf16.msra.mxu0 %v162
    %474 = vmatprep.subr.bf16.mxu0 0
    %475 = vmatpush1.bf16.msra.mxu0 %v163
    %476 = vmatprep.subr.bf16.mxu0 0
    %477 = vmatpush1.bf16.msra.mxu0 %v164
    %478 = vmatprep.subr.bf16.mxu0 0
    %479 = vmatpush1.bf16.msra.mxu0 0
    %480 = vmatprep.subr.bf16.mxu0 0
    %481 = vmatpush1.bf16.msra.mxu0 0
    %482 = vmatprep.subr.bf16.mxu0 0
    %483 = vmatpush1.bf16.msra.mxu0 0
    %484 = vmatprep.subr.bf16.mxu0 0
    %485 = vmatpush1.bf16.msra.mxu0 0
    %486 = vmatprep.subr.bf16.mxu0 0
    %487 = vmatpush1.bf16.msra.mxu0 0
    %488 = vmatprep.subr.bf16.mxu0 0
    %489 = vmatpush1.bf16.msra.mxu0 0
    %490 = vmatprep.subr.bf16.mxu0 0
    %491 = vmatpush1.bf16.msra.mxu0 0
    %492 = vmatprep.subr.bf16.mxu0 0
    %493 = vmatpush1.bf16.msra.mxu0 0
    %494 = vmatprep.mubr.bf16.mxu0 0
    %495 = vmatmul.mubr.bf16.gmra.mrb[0].mxu0 %v446
    %v496 = vpop.f32.mrb[0].mxu0
    %v497 = vadd.f32 0.0, %v496
    %v498 = vpop.f32.mrb[0].mxu0
    %v499 = vpop.f32.mrb[0].mxu0
    %v500 = vadd.f32 0.0, %v499
    %v501 = vpop.f32.mrb[0].mxu0
    %502 = vmatprep.mubr.bf16.mxu0 0
    %503 = vmatmul.mubr.bf16.gmra.mrb[0].mxu0 %v447
    %v504 = vpop.f32.mrb[0].mxu0
    %v505 = vadd.f32 0.0, %v504
    %v506 = vpop.f32.mrb[0].mxu0
    %v507 = vpop.f32.mrb[0].mxu0
    %v508 = vadd.f32 0.0, %v507
    %v509 = vpop.f32.mrb[0].mxu0
    %510 = vmatprep.mubr.bf16.mxu0 0
    %511 = vmatmul.mubr.bf16.gmra.mrb[0].mxu0 %v448
    %v512 = vpop.f32.mrb[0].mxu0
    %v513 = vadd.f32 0.0, %v512
    %v514 = vpop.f32.mrb[0].mxu0
    %v515 = vpop.f32.mrb[0].mxu0
    %v516 = vadd.f32 0.0, %v515
    %v517 = vpop.f32.mrb[0].mxu0
    %518 = vmatprep.mubr.bf16.mxu0 0
    %519 = vmatmul.mubr.bf16.gmra.mrb[0].mxu0 %v449
    %v520 = vpop.f32.mrb[0].mxu0
    %v521 = vadd.f32 0.0, %v520
    %v522 = vpop.f32.mrb[0].mxu0
    %v523 = vpop.f32.mrb[0].mxu0
    %v524 = vadd.f32 0.0, %v523
    %v525 = vpop.f32.mrb[0].mxu0
    %526 = vmatprep.mubr.bf16.mxu0 0
    %527 = vmatmul.mubr.bf16.gmra.mrb[0].mxu0 %v450
    %v528 = vpop.f32.mrb[0].mxu0
    %v529 = vadd.f32 0.0, %v528
    %v530 = vpop.f32.mrb[0].mxu0
    %v531 = vpop.f32.mrb[0].mxu0
    %v532 = vadd.f32 0.0, %v531
    %v533 = vpop.f32.mrb[0].mxu0
    %534 = vmatprep.mubr.bf16.mxu0 0
    %535 = vmatmul.mubr.bf16.gmra.mrb[0].mxu0 %v451
    %v536 = vpop.f32.mrb[0].mxu0
    %v537 = vadd.f32 0.0, %v536
    %v538 = vpop.f32.mrb[0].mxu0
    %v539 = vpop.f32.mrb[0].mxu0
    %v540 = vadd.f32 0.0, %v539
    %v541 = vpop.f32.mrb[0].mxu0
    %542 = vmatprep.mubr.bf16.mxu0 0
    %543 = vmatmul.mubr.bf16.gmra.mrb[0].mxu0 %v452
    %v544 = vpop.f32.mrb[0].mxu0
    %v545 = vadd.f32 0.0, %v544
    %v546 = vpop.f32.mrb[0].mxu0
    %v547 = vpop.f32.mrb[0].mxu0
    %v548 = vadd.f32 0.0, %v547
    %v549 = vpop.f32.mrb[0].mxu0
    %550 = vmatprep.mubr.bf16.mxu0 0
    %551 = vmatmul.mubr.bf16.gmra.mrb[0].mxu0 %v453
    %v552 = vpop.f32.mrb[0].mxu0
    %v553 = vadd.f32 0.0, %v552
    %v554 = vpop.f32.mrb[0].mxu0
    %v555 = vpop.f32.mrb[0].mxu0
    %v556 = vadd.f32 0.0, %v555
    %v557 = vpop.f32.mrb[0].mxu0
    %558 = vdwg.mxu0
    %v559 = vpack.c.bf16 %v500, %v497
    %v560 = vpack.c.bf16 %v508, %v505
    %v561 = vpack.c.bf16 %v516, %v513
    %v562 = vpack.c.bf16 %v524, %v521
    %v563 = vpack.c.bf16 %v532, %v529
    %v564 = vpack.c.bf16 %v540, %v537
    %v565 = vpack.c.bf16 %v548, %v545
    %v566 = vpack.c.bf16 %v556, %v553
    %v575 = vunpack.c.l.b16 %v559
    %v576 = vunpack.c.h.b16 %v559
    %v577 = vunpack.c.l.b16 %v560
    %v578 = vunpack.c.h.b16 %v560
    %v579 = vunpack.c.l.b16 %v561
    %v580 = vunpack.c.h.b16 %v561
    %v581 = vunpack.c.l.b16 %v562
    %v582 = vunpack.c.h.b16 %v562
    %v583 = vunpack.c.l.b16 %v563
    %v584 = vunpack.c.h.b16 %v563
    %v585 = vunpack.c.l.b16 %v564
    %v586 = vunpack.c.h.b16 %v564
    %v587 = vunpack.c.l.b16 %v565
    %v588 = vunpack.c.h.b16 %v565
    %v589 = vunpack.c.l.b16 %v566
    %v590 = vunpack.c.h.b16 %v566
    %v591 = vpack.c.b16 %v575, %v575
    %v592 = vpack.c.b16 %v576, %v576
    %v593 = vpack.c.b16 %v577, %v577
    %v594 = vpack.c.b16 %v578, %v578
    %v595 = vpack.c.b16 %v579, %v579
    %v596 = vpack.c.b16 %v580, %v580
    %v597 = vpack.c.b16 %v581, %v581
    %v598 = vpack.c.b16 %v582, %v582
    %v599 = vpack.c.b16 %v583, %v583
    %v600 = vpack.c.b16 %v584, %v584
    %v601 = vpack.c.b16 %v585, %v585
    %v602 = vpack.c.b16 %v586, %v586
    %v603 = vpack.c.b16 %v587, %v587
    %v604 = vpack.c.b16 %v588, %v588
    %v605 = vpack.c.b16 %v589, %v589
    %v606 = vpack.c.b16 %v590, %v590
    %623 = vst [vmem:[#allocation7 + $0x40] sm:$0xf] %v591
    %624 = vst [vmem:[#allocation7 + $0x44] sm:$0xf] %v592
    %625 = vst [vmem:[#allocation7 + $0x48] sm:$0xf] %v593
    %626 = vst [vmem:[#allocation7 + $0x4c] sm:$0xf] %v594
    %627 = vst [vmem:[#allocation7 + $0x50] sm:$0xf] %v595
    %628 = vst [vmem:[#allocation7 + $0x54] sm:$0xf] %v596
    %629 = vst [vmem:[#allocation7 + $0x58] sm:$0xf] %v597
    %630 = vst [vmem:[#allocation7 + $0x5c] sm:$0xf] %v598
    %631 = vst [vmem:[#allocation7 + $0x60] sm:$0xf] %v599
    %632 = vst [vmem:[#allocation7 + $0x64] sm:$0xf] %v600
    %633 = vst [vmem:[#allocation7 + $0x68] sm:$0xf] %v601
    %634 = vst [vmem:[#allocation7 + $0x6c] sm:$0xf] %v602
    %635 = vst [vmem:[#allocation7 + $0x70] sm:$0xf] %v603
    %636 = vst [vmem:[#allocation7 + $0x74] sm:$0xf] %v604
    %637 = vst [vmem:[#allocation7 + $0x78] sm:$0xf] %v605
    %638 = vst [vmem:[#allocation7 + $0x7c] sm:$0xf] %v606
    %v639 = vadd.f32 %v497, %v500
    %v640 = vadd.f32 %v639, %v505
    %v641 = vadd.f32 %v640, %v508
    %v642 = vadd.f32 %v641, %v513
    %v643 = vadd.f32 %v642, %v516
    %v644 = vadd.f32 %v643, %v521
    %v645 = vadd.f32 %v644, %v524
    %v646 = vadd.f32 %v645, %v529
    %v647 = vadd.f32 %v646, %v532
    %v648 = vadd.f32 %v647, %v537
    %v649 = vadd.f32 %v648, %v540
    %v650 = vadd.f32 %v649, %v545
    %v651 = vadd.f32 %v650, %v548
    %v652 = vadd.f32 %v651, %v553
    %v653 = vadd.f32 %v652, %v556
    %v654 = vadd.f32 %v365, %v653
    %v655 = vmul.f32 %v497, %v497
    %v656 = vmul.f32 %v500, %v500
    %v657 = vmul.f32 %v505, %v505
    %v658 = vmul.f32 %v508, %v508
    %v659 = vmul.f32 %v513, %v513
    %v660 = vmul.f32 %v516, %v516
    %v661 = vmul.f32 %v521, %v521
    %v662 = vmul.f32 %v524, %v524
    %v663 = vmul.f32 %v529, %v529
    %v664 = vmul.f32 %v532, %v532
    %v665 = vmul.f32 %v537, %v537
    %v666 = vmul.f32 %v540, %v540
    %v667 = vmul.f32 %v545, %v545
    %v668 = vmul.f32 %v548, %v548
    %v669 = vmul.f32 %v553, %v553
    %v670 = vmul.f32 %v556, %v556
    %v671 = vadd.f32 %v655, %v656
    %v672 = vadd.f32 %v671, %v657
    %v673 = vadd.f32 %v672, %v658
    %v674 = vadd.f32 %v673, %v659
    %v675 = vadd.f32 %v674, %v660
    %v676 = vadd.f32 %v675, %v661
    %v677 = vadd.f32 %v676, %v662
    %v678 = vadd.f32 %v677, %v663
    %v679 = vadd.f32 %v678, %v664
    %v680 = vadd.f32 %v679, %v665
    %v681 = vadd.f32 %v680, %v666
    %v682 = vadd.f32 %v681, %v667
    %v683 = vadd.f32 %v682, %v668
    %v684 = vadd.f32 %v683, %v669
    %v685 = vadd.f32 %v684, %v670
    %v686 = vadd.f32 %v397, %v685
    %v687 = vld [vmem:[#allocation2 + $0x80] sm:$0xf]
    %v688 = vld [vmem:[#allocation2 + $0x84] sm:$0xf]
    %v689 = vld [vmem:[#allocation2 + $0x88] sm:$0xf]
    %v690 = vld [vmem:[#allocation2 + $0x8c] sm:$0xf]
    %v691 = vld [vmem:[#allocation2 + $0x90] sm:$0xf]
    %v692 = vld [vmem:[#allocation2 + $0x94] sm:$0xf]
    %v693 = vld [vmem:[#allocation2 + $0x98] sm:$0xf]
    %v694 = vld [vmem:[#allocation2 + $0x9c] sm:$0xf]
    %v695 = vld [vmem:[#allocation2 + $0xa0] sm:$0xf]
    %v696 = vld [vmem:[#allocation2 + $0xa4] sm:$0xf]
    %v697 = vld [vmem:[#allocation2 + $0xa8] sm:$0xf]
    %v698 = vld [vmem:[#allocation2 + $0xac] sm:$0xf]
    %v699 = vld [vmem:[#allocation2 + $0xb0] sm:$0xf]
    %v700 = vld [vmem:[#allocation2 + $0xb4] sm:$0xf]
    %v701 = vld [vmem:[#allocation2 + $0xb8] sm:$0xf]
    %v702 = vld [vmem:[#allocation2 + $0xbc] sm:$0xf]
    %v719 = vunpack.c.l.b16 %v687
    %v720 = vunpack.c.l.b16 %v688
    %v721 = vunpack.c.l.b16 %v689
    %v722 = vunpack.c.l.b16 %v690
    %v723 = vunpack.c.l.b16 %v691
    %v724 = vunpack.c.l.b16 %v692
    %v725 = vunpack.c.l.b16 %v693
    %v726 = vunpack.c.l.b16 %v694
    %v727 = vunpack.c.l.b16 %v695
    %v728 = vunpack.c.l.b16 %v696
    %v729 = vunpack.c.l.b16 %v697
    %v730 = vunpack.c.l.b16 %v698
    %v731 = vunpack.c.l.b16 %v699
    %v732 = vunpack.c.l.b16 %v700
    %v733 = vunpack.c.l.b16 %v701
    %v734 = vunpack.c.l.b16 %v702
    %v735 = vpack.c.b16 %v720, %v719
    %v736 = vpack.c.b16 %v722, %v721
    %v737 = vpack.c.b16 %v724, %v723
    %v738 = vpack.c.b16 %v726, %v725
    %v739 = vpack.c.b16 %v728, %v727
    %v740 = vpack.c.b16 %v730, %v729
    %v741 = vpack.c.b16 %v732, %v731
    %v742 = vpack.c.b16 %v734, %v733
    %751 = vmatprep.subr.bf16.mxu0 0
    %752 = vmatpush1.bf16.msra.mxu0 %v157
    %753 = vmatprep.subr.bf16.mxu0 0
    %754 = vmatpush1.bf16.msra.mxu0 %v158
    %755 = vmatprep.subr.bf16.mxu0 0
    %756 = vmatpush1.bf16.msra.mxu0 %v159
    %757 = vmatprep.subr.bf16.mxu0 0
    %758 = vmatpush1.bf16.msra.mxu0 %v160
    %759 = vmatprep.subr.bf16.mxu0 0
    %760 = vmatpush1.bf16.msra.mxu0 %v161
    %761 = vmatprep.subr.bf16.mxu0 0
    %762 = vmatpush1.bf16.msra.mxu0 %v162
    %763 = vmatprep.subr.bf16.mxu0 0
    %764 = vmatpush1.bf16.msra.mxu0 %v163
    %765 = vmatprep.subr.bf16.mxu0 0
    %766 = vmatpush1.bf16.msra.mxu0 %v164
    %767 = vmatprep.subr.bf16.mxu0 0
    %768 = vmatpush1.bf16.msra.mxu0 0
    %769 = vmatprep.subr.bf16.mxu0 0
    %770 = vmatpush1.bf16.msra.mxu0 0
    %771 = vmatprep.subr.bf16.mxu0 0
    %772 = vmatpush1.bf16.msra.mxu0 0
    %773 = vmatprep.subr.bf16.mxu0 0
    %774 = vmatpush1.bf16.msra.mxu0 0
    %775 = vmatprep.subr.bf16.mxu0 0
    %776 = vmatpush1.bf16.msra.mxu0 0
    %777 = vmatprep.subr.bf16.mxu0 0
    %778 = vmatpush1.bf16.msra.mxu0 0
    %779 = vmatprep.subr.bf16.mxu0 0
    %780 = vmatpush1.bf16.msra.mxu0 0
    %781 = vmatprep.subr.bf16.mxu0 0
    %782 = vmatpush1.bf16.msra.mxu0 0
    %783 = vmatprep.mubr.bf16.mxu0 0
    %784 = vmatmul.mubr.bf16.gmra.mrb[0].mxu0 %v735
    %v785 = vpop.f32.mrb[0].mxu0
    %v786 = vadd.f32 0.0, %v785
    %v787 = vpop.f32.mrb[0].mxu0
    %v788 = vpop.f32.mrb[0].mxu0
    %v789 = vadd.f32 0.0, %v788
    %v790 = vpop.f32.mrb[0].mxu0
    %791 = vmatprep.mubr.bf16.mxu0 0
    %792 = vmatmul.mubr.bf16.gmra.mrb[0].mxu0 %v736
    %v793 = vpop.f32.mrb[0].mxu0
    %v794 = vadd.f32 0.0, %v793
    %v795 = vpop.f32.mrb[0].mxu0
    %v796 = vpop.f32.mrb[0].mxu0
    %v797 = vadd.f32 0.0, %v796
    %v798 = vpop.f32.mrb[0].mxu0
    %799 = vmatprep.mubr.bf16.mxu0 0
    %800 = vmatmul.mubr.bf16.gmra.mrb[0].mxu0 %v737
    %v801 = vpop.f32.mrb[0].mxu0
    %v802 = vadd.f32 0.0, %v801
    %v803 = vpop.f32.mrb[0].mxu0
    %v804 = vpop.f32.mrb[0].mxu0
    %v805 = vadd.f32 0.0, %v804
    %v806 = vpop.f32.mrb[0].mxu0
    %807 = vmatprep.mubr.bf16.mxu0 0
    %808 = vmatmul.mubr.bf16.gmra.mrb[0].mxu0 %v738
    %v809 = vpop.f32.mrb[0].mxu0
    %v810 = vadd.f32 0.0, %v809
    %v811 = vpop.f32.mrb[0].mxu0
    %v812 = vpop.f32.mrb[0].mxu0
    %v813 = vadd.f32 0.0, %v812
    %v814 = vpop.f32.mrb[0].mxu0
    %815 = vmatprep.mubr.bf16.mxu0 0
    %816 = vmatmul.mubr.bf16.gmra.mrb[0].mxu0 %v739
    %v817 = vpop.f32.mrb[0].mxu0
    %v818 = vadd.f32 0.0, %v817
    %v819 = vpop.f32.mrb[0].mxu0
    %v820 = vpop.f32.mrb[0].mxu0
    %v821 = vadd.f32 0.0, %v820
    %v822 = vpop.f32.mrb[0].mxu0
    %823 = vmatprep.mubr.bf16.mxu0 0
    %824 = vmatmul.mubr.bf16.gmra.mrb[0].mxu0 %v740
    %v825 = vpop.f32.mrb[0].mxu0
    %v826 = vadd.f32 0.0, %v825
    %v827 = vpop.f32.mrb[0].mxu0
    %v828 = vpop.f32.mrb[0].mxu0
    %v829 = vadd.f32 0.0, %v828
    %v830 = vpop.f32.mrb[0].mxu0
    %831 = vmatprep.mubr.bf16.mxu0 0
    %832 = vmatmul.mubr.bf16.gmra.mrb[0].mxu0 %v741
    %v833 = vpop.f32.mrb[0].mxu0
    %v834 = vadd.f32 0.0, %v833
    %v835 = vpop.f32.mrb[0].mxu0
    %v836 = vpop.f32.mrb[0].mxu0
    %v837 = vadd.f32 0.0, %v836
    %v838 = vpop.f32.mrb[0].mxu0
    %839 = vmatprep.mubr.bf16.mxu0 0
    %840 = vmatmul.mubr.bf16.gmra.mrb[0].mxu0 %v742
    %v841 = vpop.f32.mrb[0].mxu0
    %v842 = vadd.f32 0.0, %v841
    %v843 = vpop.f32.mrb[0].mxu0
    %v844 = vpop.f32.mrb[0].mxu0
    %v845 = vadd.f32 0.0, %v844
    %v846 = vpop.f32.mrb[0].mxu0
    %847 = vdwg.mxu0
    %v848 = vpack.c.bf16 %v789, %v786
    %v849 = vpack.c.bf16 %v797, %v794
    %v850 = vpack.c.bf16 %v805, %v802
    %v851 = vpack.c.bf16 %v813, %v810
    %v852 = vpack.c.bf16 %v821, %v818
    %v853 = vpack.c.bf16 %v829, %v826
    %v854 = vpack.c.bf16 %v837, %v834
    %v855 = vpack.c.bf16 %v845, %v842
    %v864 = vunpack.c.l.b16 %v848
    %v865 = vunpack.c.h.b16 %v848
    %v866 = vunpack.c.l.b16 %v849
    %v867 = vunpack.c.h.b16 %v849
    %v868 = vunpack.c.l.b16 %v850
    %v869 = vunpack.c.h.b16 %v850
    %v870 = vunpack.c.l.b16 %v851
    %v871 = vunpack.c.h.b16 %v851
    %v872 = vunpack.c.l.b16 %v852
    %v873 = vunpack.c.h.b16 %v852
    %v874 = vunpack.c.l.b16 %v853
    %v875 = vunpack.c.h.b16 %v853
    %v876 = vunpack.c.l.b16 %v854
    %v877 = vunpack.c.h.b16 %v854
    %v878 = vunpack.c.l.b16 %v855
    %v879 = vunpack.c.h.b16 %v855
    %v880 = vpack.c.b16 %v864, %v864
    %v881 = vpack.c.b16 %v865, %v865
    %v882 = vpack.c.b16 %v866, %v866
    %v883 = vpack.c.b16 %v867, %v867
    %v884 = vpack.c.b16 %v868, %v868
    %v885 = vpack.c.b16 %v869, %v869
    %v886 = vpack.c.b16 %v870, %v870
    %v887 = vpack.c.b16 %v871, %v871
    %v888 = vpack.c.b16 %v872, %v872
    %v889 = vpack.c.b16 %v873, %v873
    %v890 = vpack.c.b16 %v874, %v874
    %v891 = vpack.c.b16 %v875, %v875
    %v892 = vpack.c.b16 %v876, %v876
    %v893 = vpack.c.b16 %v877, %v877
    %v894 = vpack.c.b16 %v878, %v878
    %v895 = vpack.c.b16 %v879, %v879
    %912 = vst [vmem:[#allocation7 + $0x80] sm:$0xf] %v880
    %913 = vst [vmem:[#allocation7 + $0x84] sm:$0xf] %v881
    %914 = vst [vmem:[#allocation7 + $0x88] sm:$0xf] %v882
    %915 = vst [vmem:[#allocation7 + $0x8c] sm:$0xf] %v883
    %916 = vst [vmem:[#allocation7 + $0x90] sm:$0xf] %v884
    %917 = vst [vmem:[#allocation7 + $0x94] sm:$0xf] %v885
    %918 = vst [vmem:[#allocation7 + $0x98] sm:$0xf] %v886
    %919 = vst [vmem:[#allocation7 + $0x9c] sm:$0xf] %v887
    %920 = vst [vmem:[#allocation7 + $0xa0] sm:$0xf] %v888
    %921 = vst [vmem:[#allocation7 + $0xa4] sm:$0xf] %v889
    %922 = vst [vmem:[#allocation7 + $0xa8] sm:$0xf] %v890
    %923 = vst [vmem:[#allocation7 + $0xac] sm:$0xf] %v891
    %924 = vst [vmem:[#allocation7 + $0xb0] sm:$0xf] %v892
    %925 = vst [vmem:[#allocation7 + $0xb4] sm:$0xf] %v893
    %926 = vst [vmem:[#allocation7 + $0xb8] sm:$0xf] %v894
    %927 = vst [vmem:[#allocation7 + $0xbc] sm:$0xf] %v895
    %v928 = vadd.f32 %v786, %v789
    %v929 = vadd.f32 %v928, %v794
    %v930 = vadd.f32 %v929, %v797
    %v931 = vadd.f32 %v930, %v802
    %v932 = vadd.f32 %v931, %v805
    %v933 = vadd.f32 %v932, %v810
    %v934 = vadd.f32 %v933, %v813
    %v935 = vadd.f32 %v934, %v818
    %v936 = vadd.f32 %v935, %v821
    %v937 = vadd.f32 %v936, %v826
    %v938 = vadd.f32 %v937, %v829
    %v939 = vadd.f32 %v938, %v834
    %v940 = vadd.f32 %v939, %v837
    %v941 = vadd.f32 %v940, %v842
    %v942 = vadd.f32 %v941, %v845
    %v943 = vadd.f32 %v654, %v942
    %v944 = vmul.f32 %v786, %v786
    %v945 = vmul.f32 %v789, %v789
    %v946 = vmul.f32 %v794, %v794
    %v947 = vmul.f32 %v797, %v797
    %v948 = vmul.f32 %v802, %v802
    %v949 = vmul.f32 %v805, %v805
    %v950 = vmul.f32 %v810, %v810
    %v951 = vmul.f32 %v813, %v813
    %v952 = vmul.f32 %v818, %v818
    %v953 = vmul.f32 %v821, %v821
    %v954 = vmul.f32 %v826, %v826
    %v955 = vmul.f32 %v829, %v829
    %v956 = vmul.f32 %v834, %v834
    %v957 = vmul.f32 %v837, %v837
    %v958 = vmul.f32 %v842, %v842
    %v959 = vmul.f32 %v845, %v845
    %v960 = vadd.f32 %v944, %v945
    %v961 = vadd.f32 %v960, %v946
    %v962 = vadd.f32 %v961, %v947
    %v963 = vadd.f32 %v962, %v948
    %v964 = vadd.f32 %v963, %v949
    %v965 = vadd.f32 %v964, %v950
    %v966 = vadd.f32 %v965, %v951
    %v967 = vadd.f32 %v966, %v952
    %v968 = vadd.f32 %v967, %v953
    %v969 = vadd.f32 %v968, %v954
    %v970 = vadd.f32 %v969, %v955
    %v971 = vadd.f32 %v970, %v956
    %v972 = vadd.f32 %v971, %v957
    %v973 = vadd.f32 %v972, %v958
    %v974 = vadd.f32 %v973, %v959
    %v975 = vadd.f32 %v686, %v974
    %v976 = vld [vmem:[#allocation2 + $0xc0] sm:$0xf]
    %v977 = vld [vmem:[#allocation2 + $0xc4] sm:$0xf]
    %v978 = vld [vmem:[#allocation2 + $0xc8] sm:$0xf]
    %v979 = vld [vmem:[#allocation2 + $0xcc] sm:$0xf]
    %v980 = vld [vmem:[#allocation2 + $0xd0] sm:$0xf]
    %v981 = vld [vmem:[#allocation2 + $0xd4] sm:$0xf]
    %v982 = vld [vmem:[#allocation2 + $0xd8] sm:$0xf]
    %v983 = vld [vmem:[#allocation2 + $0xdc] sm:$0xf]
    %v984 = vld [vmem:[#allocation2 + $0xe0] sm:$0xf]
    %v985 = vld [vmem:[#allocation2 + $0xe4] sm:$0xf]
    %v986 = vld [vmem:[#allocation2 + $0xe8] sm:$0xf]
    %v987 = vld [vmem:[#allocation2 + $0xec] sm:$0xf]
    %v988 = vld [vmem:[#allocation2 + $0xf0] sm:$0xf]
    %v989 = vld [vmem:[#allocation2 + $0xf4] sm:$0xf]
    %v990 = vld [vmem:[#allocation2 + $0xf8] sm:$0xf]
    %v991 = vld [vmem:[#allocation2 + $0xfc] sm:$0xf]
    %v1008 = vunpack.c.l.b16 %v976
    %v1009 = vunpack.c.l.b16 %v977
    %v1010 = vunpack.c.l.b16 %v978
    %v1011 = vunpack.c.l.b16 %v979
    %v1012 = vunpack.c.l.b16 %v980
    %v1013 = vunpack.c.l.b16 %v981
    %v1014 = vunpack.c.l.b16 %v982
    %v1015 = vunpack.c.l.b16 %v983
    %v1016 = vunpack.c.l.b16 %v984
    %v1017 = vunpack.c.l.b16 %v985
    %v1018 = vunpack.c.l.b16 %v986
    %v1019 = vunpack.c.l.b16 %v987
    %v1020 = vunpack.c.l.b16 %v988
    %v1021 = vunpack.c.l.b16 %v989
    %v1022 = vunpack.c.l.b16 %v990
    %v1023 = vunpack.c.l.b16 %v991
    %v1024 = vpack.c.b16 %v1009, %v1008
    %v1025 = vpack.c.b16 %v1011, %v1010
    %v1026 = vpack.c.b16 %v1013, %v1012
    %v1027 = vpack.c.b16 %v1015, %v1014
    %v1028 = vpack.c.b16 %v1017, %v1016
    %v1029 = vpack.c.b16 %v1019, %v1018
    %v1030 = vpack.c.b16 %v1021, %v1020
    %v1031 = vpack.c.b16 %v1023, %v1022
    %1040 = vmatprep.subr.bf16.mxu0 0
    %1041 = vmatpush1.bf16.msra.mxu0 %v157
    %1042 = vmatprep.subr.bf16.mxu0 0
    %1043 = vmatpush1.bf16.msra.mxu0 %v158
    %1044 = vmatprep.subr.bf16.mxu0 0
    %1045 = vmatpush1.bf16.msra.mxu0 %v159
    %1046 = vmatprep.subr.bf16.mxu0 0
    %1047 = vmatpush1.bf16.msra.mxu0 %v160
    %1048 = vmatprep.subr.bf16.mxu0 0
    %1049 = vmatpush1.bf16.msra.mxu0 %v161
    %1050 = vmatprep.subr.bf16.mxu0 0
    %1051 = vmatpush1.bf16.msra.mxu0 %v162
    %1052 = vmatprep.subr.bf16.mxu0 0
    %1053 = vmatpush1.bf16.msra.mxu0 %v163
    %1054 = vmatprep.subr.bf16.mxu0 0
    %1055 = vmatpush1.bf16.msra.mxu0 %v164
    %1056 = vmatprep.subr.bf16.mxu0 0
    %1057 = vmatpush1.bf16.msra.mxu0 0
    %1058 = vmatprep.subr.bf16.mxu0 0
    %1059 = vmatpush1.bf16.msra.mxu0 0
    %1060 = vmatprep.subr.bf16.mxu0 0
    %1061 = vmatpush1.bf16.msra.mxu0 0
    %1062 = vmatprep.subr.bf16.mxu0 0
    %1063 = vmatpush1.bf16.msra.mxu0 0
    %1064 = vmatprep.subr.bf16.mxu0 0
    %1065 = vmatpush1.bf16.msra.mxu0 0
    %1066 = vmatprep.subr.bf16.mxu0 0
    %1067 = vmatpush1.bf16.msra.mxu0 0
    %1068 = vmatprep.subr.bf16.mxu0 0
    %1069 = vmatpush1.bf16.msra.mxu0 0
    %1070 = vmatprep.subr.bf16.mxu0 0
    %1071 = vmatpush1.bf16.msra.mxu0 0
    %1072 = vmatprep.mubr.bf16.mxu0 0
    %1073 = vmatmul.mubr.bf16.gmra.mrb[0].mxu0 %v1024
    %v1074 = vpop.f32.mrb[0].mxu0
    %v1075 = vadd.f32 0.0, %v1074
    %v1076 = vpop.f32.mrb[0].mxu0
    %v1077 = vpop.f32.mrb[0].mxu0
    %v1078 = vadd.f32 0.0, %v1077
    %v1079 = vpop.f32.mrb[0].mxu0
    %1080 = vmatprep.mubr.bf16.mxu0 0
    %1081 = vmatmul.mubr.bf16.gmra.mrb[0].mxu0 %v1025
    %v1082 = vpop.f32.mrb[0].mxu0
    %v1083 = vadd.f32 0.0, %v1082
    %v1084 = vpop.f32.mrb[0].mxu0
    %v1085 = vpop.f32.mrb[0].mxu0
    %v1086 = vadd.f32 0.0, %v1085
    %v1087 = vpop.f32.mrb[0].mxu0
    %1088 = vmatprep.mubr.bf16.mxu0 0
    %1089 = vmatmul.mubr.bf16.gmra.mrb[0].mxu0 %v1026
    %v1090 = vpop.f32.mrb[0].mxu0
    %v1091 = vadd.f32 0.0, %v1090
    %v1092 = vpop.f32.mrb[0].mxu0
    %v1093 = vpop.f32.mrb[0].mxu0
    %v1094 = vadd.f32 0.0, %v1093
    %v1095 = vpop.f32.mrb[0].mxu0
    %1096 = vmatprep.mubr.bf16.mxu0 0
    %1097 = vmatmul.mubr.bf16.gmra.mrb[0].mxu0 %v1027
    %v1098 = vpop.f32.mrb[0].mxu0
    %v1099 = vadd.f32 0.0, %v1098
    %v1100 = vpop.f32.mrb[0].mxu0
    %v1101 = vpop.f32.mrb[0].mxu0
    %v1102 = vadd.f32 0.0, %v1101
    %v1103 = vpop.f32.mrb[0].mxu0
    %1104 = vmatprep.mubr.bf16.mxu0 0
    %1105 = vmatmul.mubr.bf16.gmra.mrb[0].mxu0 %v1028
    %v1106 = vpop.f32.mrb[0].mxu0
    %v1107 = vadd.f32 0.0, %v1106
    %v1108 = vpop.f32.mrb[0].mxu0
    %v1109 = vpop.f32.mrb[0].mxu0
    %v1110 = vadd.f32 0.0, %v1109
    %v1111 = vpop.f32.mrb[0].mxu0
    %1112 = vmatprep.mubr.bf16.mxu0 0
    %1113 = vmatmul.mubr.bf16.gmra.mrb[0].mxu0 %v1029
    %v1114 = vpop.f32.mrb[0].mxu0
    %v1115 = vadd.f32 0.0, %v1114
    %v1116 = vpop.f32.mrb[0].mxu0
    %v1117 = vpop.f32.mrb[0].mxu0
    %v1118 = vadd.f32 0.0, %v1117
    %v1119 = vpop.f32.mrb[0].mxu0
    %1120 = vmatprep.mubr.bf16.mxu0 0
    %1121 = vmatmul.mubr.bf16.gmra.mrb[0].mxu0 %v1030
    %v1122 = vpop.f32.mrb[0].mxu0
    %v1123 = vadd.f32 0.0, %v1122
    %v1124 = vpop.f32.mrb[0].mxu0
    %v1125 = vpop.f32.mrb[0].mxu0
    %v1126 = vadd.f32 0.0, %v1125
    %v1127 = vpop.f32.mrb[0].mxu0
    %1128 = vmatprep.mubr.bf16.mxu0 0
    %1129 = vmatmul.mubr.bf16.gmra.mrb[0].mxu0 %v1031
    %v1130 = vpop.f32.mrb[0].mxu0
    %v1131 = vadd.f32 0.0, %v1130
    %v1132 = vpop.f32.mrb[0].mxu0
    %v1133 = vpop.f32.mrb[0].mxu0
    %v1134 = vadd.f32 0.0, %v1133
    %v1135 = vpop.f32.mrb[0].mxu0
    %1136 = vdwg.mxu0
    %v1137 = vpack.c.bf16 %v1078, %v1075
    %v1138 = vpack.c.bf16 %v1086, %v1083
    %v1139 = vpack.c.bf16 %v1094, %v1091
    %v1140 = vpack.c.bf16 %v1102, %v1099
    %v1141 = vpack.c.bf16 %v1110, %v1107
    %v1142 = vpack.c.bf16 %v1118, %v1115
    %v1143 = vpack.c.bf16 %v1126, %v1123
    %v1144 = vpack.c.bf16 %v1134, %v1131
    %v1153 = vunpack.c.l.b16 %v1137
    %v1154 = vunpack.c.h.b16 %v1137
    %v1155 = vunpack.c.l.b16 %v1138
    %v1156 = vunpack.c.h.b16 %v1138
    %v1157 = vunpack.c.l.b16 %v1139
    %v1158 = vunpack.c.h.b16 %v1139
    %v1159 = vunpack.c.l.b16 %v1140
    %v1160 = vunpack.c.h.b16 %v1140
    %v1161 = vunpack.c.l.b16 %v1141
    %v1162 = vunpack.c.h.b16 %v1141
    %v1163 = vunpack.c.l.b16 %v1142
    %v1164 = vunpack.c.h.b16 %v1142
    %v1165 = vunpack.c.l.b16 %v1143
    %v1166 = vunpack.c.h.b16 %v1143
    %v1167 = vunpack.c.l.b16 %v1144
    %v1168 = vunpack.c.h.b16 %v1144
    %v1169 = vpack.c.b16 %v1153, %v1153
    %v1170 = vpack.c.b16 %v1154, %v1154
    %v1171 = vpack.c.b16 %v1155, %v1155
    %v1172 = vpack.c.b16 %v1156, %v1156
    %v1173 = vpack.c.b16 %v1157, %v1157
    %v1174 = vpack.c.b16 %v1158, %v1158
    %v1175 = vpack.c.b16 %v1159, %v1159
    %v1176 = vpack.c.b16 %v1160, %v1160
    %v1177 = vpack.c.b16 %v1161, %v1161
    %v1178 = vpack.c.b16 %v1162, %v1162
    %v1179 = vpack.c.b16 %v1163, %v1163
    %v1180 = vpack.c.b16 %v1164, %v1164
    %v1181 = vpack.c.b16 %v1165, %v1165
    %v1182 = vpack.c.b16 %v1166, %v1166
    %v1183 = vpack.c.b16 %v1167, %v1167
    %v1184 = vpack.c.b16 %v1168, %v1168
    %1201 = vst [vmem:[#allocation7 + $0xc0] sm:$0xf] %v1169
    %1202 = vst [vmem:[#allocation7 + $0xc4] sm:$0xf] %v1170
    %1203 = vst [vmem:[#allocation7 + $0xc8] sm:$0xf] %v1171
    %1204 = vst [vmem:[#allocation7 + $0xcc] sm:$0xf] %v1172
    %1205 = vst [vmem:[#allocation7 + $0xd0] sm:$0xf] %v1173
    %1206 = vst [vmem:[#allocation7 + $0xd4] sm:$0xf] %v1174
    %1207 = vst [vmem:[#allocation7 + $0xd8] sm:$0xf] %v1175
    %1208 = vst [vmem:[#allocation7 + $0xdc] sm:$0xf] %v1176
    %1209 = vst [vmem:[#allocation7 + $0xe0] sm:$0xf] %v1177
    %1210 = vst [vmem:[#allocation7 + $0xe4] sm:$0xf] %v1178
    %1211 = vst [vmem:[#allocation7 + $0xe8] sm:$0xf] %v1179
    %1212 = vst [vmem:[#allocation7 + $0xec] sm:$0xf] %v1180
    %1213 = vst [vmem:[#allocation7 + $0xf0] sm:$0xf] %v1181
    %1214 = vst [vmem:[#allocation7 + $0xf4] sm:$0xf] %v1182
    %1215 = vst [vmem:[#allocation7 + $0xf8] sm:$0xf] %v1183
    %1216 = vst [vmem:[#allocation7 + $0xfc] sm:$0xf] %v1184
    %v1217 = vadd.f32 %v1075, %v1078
    %v1218 = vadd.f32 %v1217, %v1083
    %v1219 = vadd.f32 %v1218, %v1086
    %v1220 = vadd.f32 %v1219, %v1091
    %v1221 = vadd.f32 %v1220, %v1094
    %v1222 = vadd.f32 %v1221, %v1099
    %v1223 = vadd.f32 %v1222, %v1102
    %v1224 = vadd.f32 %v1223, %v1107
    %v1225 = vadd.f32 %v1224, %v1110
    %v1226 = vadd.f32 %v1225, %v1115
    %v1227 = vadd.f32 %v1226, %v1118
    %v1228 = vadd.f32 %v1227, %v1123
    %v1229 = vadd.f32 %v1228, %v1126
    %v1230 = vadd.f32 %v1229, %v1131
    %v1231 = vadd.f32 %v1230, %v1134
    %v1232 = vadd.f32 %v943, %v1231
    %v1233 = vmul.f32 %v1075, %v1075
    %v1234 = vmul.f32 %v1078, %v1078
    %v1235 = vmul.f32 %v1083, %v1083
    %v1236 = vmul.f32 %v1086, %v1086
    %v1237 = vmul.f32 %v1091, %v1091
    %v1238 = vmul.f32 %v1094, %v1094
    %v1239 = vmul.f32 %v1099, %v1099
    %v1240 = vmul.f32 %v1102, %v1102
    %v1241 = vmul.f32 %v1107, %v1107
    %v1242 = vmul.f32 %v1110, %v1110
    %v1243 = vmul.f32 %v1115, %v1115
    %v1244 = vmul.f32 %v1118, %v1118
    %v1245 = vmul.f32 %v1123, %v1123
    %v1246 = vmul.f32 %v1126, %v1126
    %v1247 = vmul.f32 %v1131, %v1131
    %v1248 = vmul.f32 %v1134, %v1134
    %v1249 = vadd.f32 %v1233, %v1234
    %v1250 = vadd.f32 %v1249, %v1235
    %v1251 = vadd.f32 %v1250, %v1236
    %v1252 = vadd.f32 %v1251, %v1237
    %v1253 = vadd.f32 %v1252, %v1238
    %v1254 = vadd.f32 %v1253, %v1239
    %v1255 = vadd.f32 %v1254, %v1240
    %v1256 = vadd.f32 %v1255, %v1241
    %v1257 = vadd.f32 %v1256, %v1242
    %v1258 = vadd.f32 %v1257, %v1243
    %v1259 = vadd.f32 %v1258, %v1244
    %v1260 = vadd.f32 %v1259, %v1245
    %v1261 = vadd.f32 %v1260, %v1246
    %v1262 = vadd.f32 %v1261, %v1247
    %v1263 = vadd.f32 %v1262, %v1248
    %v1264 = vadd.f32 %v975, %v1263
    %1265 = vst [vmem:[#allocation8] sm:$0xff] %v1232
    %1266 = vst [vmem:[#allocation10] sm:$0xff] %v1264
    // Predicated region
    $region18: #{tpu_custom_call.1} parent=1 // pred_check
      _
    $region19: #{tpu_custom_call.1} parent=1 // pred_check_branch
      %1268 = sbr.rel (0) target = $region21
    $region20: #{tpu_custom_call.1} parent=1 // pred_region
      %s1270 = ssub.s32 4096, 4096
      %1271 = vsyncadd [#allocation4], %s1270
      %s1272 = sshll.u32 [#allocation7], 4
      %s1273 = int_to_ptr.vmem [resolvable:$true] %s1272
      %1278 = dma.vmem_to_hbm [thread:$0]  %s1273, 4096, %s2, [#allocation4], 64, 64, 4
    $region21: #{tpu_custom_call.1} parent=1 // pred_fallthru
      _
    // Predicated region
    $region22: #{tpu_custom_call.1} parent=1 // pred_check
      _
    $region23: #{tpu_custom_call.1} parent=1 // pred_check_branch
      %1280 = sbr.rel (0) target = $region25
    $region24: #{tpu_custom_call.1} parent=1 // pred_region
      %s1282 = ssub.s32 128, 128
      %1283 = vsyncadd [#allocation9], %s1282
      %s1285 = sshll.u32 [#allocation8], 4
      %s1286 = int_to_ptr.vmem [resolvable:$true] %s1285
      %1288 = dma.vmem_to_hbm [thread:$0]  %s1286, 128, %s3, [#allocation9]
    $region25: #{tpu_custom_call.1} parent=1 // pred_fallthru
      _
    // Predicated region
    $region26: #{tpu_custom_call.1} parent=1 // pred_check
      _
    $region27: #{tpu_custom_call.1} parent=1 // pred_check_branch
      %1290 = sbr.rel (0) target = $region29
    $region28: #{tpu_custom_call.1} parent=1 // pred_region
      %s1292 = ssub.s32 128, 128
      %1293 = vsyncadd [#allocation9], %s1292
      %s1295 = sshll.u32 [#allocation10], 4
      %s1296 = int_to_ptr.vmem [resolvable:$true] %s1295
      %1298 = dma.vmem_to_hbm [thread:$0]  %s1296, 128, %s4, [#allocation9]
    $region29: #{tpu_custom_call.1} parent=1 // pred_fallthru
      _
    // Predicated region
    $region30: #{tpu_custom_call.1} parent=1 // pred_check
      _
    $region31: #{tpu_custom_call.1} parent=1 // pred_check_branch
      %1300 = sbr.rel (0) target = $region33
    $region32: #{tpu_custom_call.1} parent=1 // pred_region
      %1301 = dma.done [#allocation4], 4096
    $region33: #{tpu_custom_call.1} parent=1 // pred_fallthru
      _
    // Predicated region
    $region34: #{tpu_custom_call.1} parent=1 // pred_check
      _
    $region35: #{tpu_custom_call.1} parent=1 // pred_check_branch
      %1303 = sbr.rel (0) target = $region37
    $region36: #{tpu_custom_call.1} parent=1 // pred_region
      %1304 = dma.done [#allocation9], 128
    $region37: #{tpu_custom_call.1} parent=1 // pred_fallthru
      _
    // Predicated region
    $region38: #{tpu_custom_call.1} parent=1 // pred_check
      _
    $region39: #{tpu_custom_call.1} parent=1 // pred_check_branch
      %1306 = sbr.rel (0) target = $region41
    $region40: #{tpu_custom_call.1} parent=1 // pred_region
      %1307 = dma.done [#allocation9], 128
    $region41: #{tpu_custom_call.1} parent=1 // pred_fallthru
      _
    %1308 = vsyncpa [#allocation3], 1
    %1309 = vsyncpa [#allocation6], 1
    %1310 = vsyncpa [#allocation4], 1
    %1311 = vsyncpa [#allocation9], 1

</llo_original>
